<compile_context>
chip_gen: v7x
topology: tpu7x:2x2x1
jax: 0.10.0
libtpu: 0.0.40
codegen_flags: <defaults>
</compile_context>

<pallas_src>
import jax
import jax.numpy as jnp
from jax.experimental import pallas as pl
from jax.experimental.pallas import tpu as pltpu

BLOCK_SIZE = 128
N_HEAD = 6
PER_HEAD_DIM = 64
N_EMBD = N_HEAD * PER_HEAD_DIM       # 384
HEAD_SIZE = PER_HEAD_DIM             # 64 (head_size passed to Head(...))

_PAD = 128                           # per-projection lane width after padding


def head_kernel(x_ref, w_ref, o_ref):
    # x_ref: (Bb, T, C) bf16; w_ref: (C, 3*128) bf16 fused+padded [Wq*s|0|Wk|0|Wv|0]
    # o_ref: (Bb, T, H) f32
    Bb, T, C = x_ref.shape
    H = o_ref.shape[-1]
    P = _PAD

    # ---- fused QKV projection: one (Bb*T, C) @ (C, 3*128) bf16 MXU matmul ----
    x2d = x_ref[...].reshape(Bb * T, C)                              # already bf16
    qkv = jnp.dot(x2d, w_ref[...], preferred_element_type=jnp.float32)
    qkv = qkv.reshape(Bb, T, 3 * P)

    # 128-lane-aligned slices (free vreg selects); lanes H..127 are exactly zero.
    q = qkv[:, :, 0 * P:1 * P].astype(jnp.bfloat16)   # 1/sqrt(C) folded into Wq
    k = qkv[:, :, 1 * P:2 * P].astype(jnp.bfloat16)
    v = qkv[:, :, 2 * P:3 * P].astype(jnp.bfloat16)

    # ---- attention scores: batched q @ k^T (padded lanes are zero -> exact) ----
    s = jax.lax.dot_general(
        q, k,
        dimension_numbers=(((2,), (2,)), ((0,), (0,))),
        preferred_element_type=jnp.float32)                          # (Bb, T, T)

    # ---- causal mask (finite fill so no NaN can ever appear) ----
    row = jax.lax.broadcasted_iota(jnp.int32, (T, T), 0)
    col = jax.lax.broadcasted_iota(jnp.int32, (T, T), 1)
    s = jnp.where((col <= row)[None, :, :], s, jnp.float32(-1e30))

    # ---- numerically stable softmax in f32; denominator applied after p@v ----
    e = jnp.exp(s - jnp.max(s, axis=-1, keepdims=True))              # (Bb, T, T)
    l = jnp.sum(e, axis=-1, keepdims=True)                           # (Bb, T, 1)

    pv = jax.lax.dot_general(
        e.astype(jnp.bfloat16), v,
        dimension_numbers=(((2,), (1,)), ((0,), (0,))),
        preferred_element_type=jnp.float32)                          # (Bb, T, 128)

    out = pv[:, :, :H] * pl.reciprocal(l, approx=True)               # (Bb, T, H)
    o_ref[...] = out.astype(o_ref.dtype)


def head_forward(x, wq, wk, wv, *, block_b=None):
    """x: (B, T, C) f32; wq/wk/wv: (C, H) f32 -> (B, T, H) f32."""
    B, T, C = x.shape
    H = wq.shape[1]
    assert T <= BLOCK_SIZE, "sequence length must not exceed BLOCK_SIZE"
    assert wq.shape == (C, H) and wk.shape == (C, H) and wv.shape == (C, H)
    P = _PAD
    assert H <= P

    # Batch rows per grid step: grid >= 4 so both v7x TensorCores get >= 2
    # pipelined steps each (amortizes ~0.35us/step and hides the x DMA).
    if block_b is None:
        block_b = min(B, 4)
    while B % block_b:
        block_b -= 1

    # One-time weight prep: fold the attention scale into Wq, fuse Q/K/V, pad each
    # projection to a 128-lane-aligned slot, and cast to bf16.
    w_qkv = jnp.zeros((C, 3 * P), jnp.float32)
    w_qkv = w_qkv.at[:, 0 * P:0 * P + H].set(wq * (C ** -0.5))
    w_qkv = w_qkv.at[:, 1 * P:1 * P + H].set(wk)
    w_qkv = w_qkv.at[:, 2 * P:2 * P + H].set(wv)
    w_qkv = w_qkv.astype(jnp.bfloat16)

    # Cast x once here (halves the dominant HBM->VMEM traffic; no in-kernel pack).
    x_bf16 = x.astype(jnp.bfloat16)

    return pl.pallas_call(
        head_kernel,
        out_shape=jax.ShapeDtypeStruct((B, T, H), jnp.float32),
        grid_spec=pltpu.PrefetchScalarGridSpec(
            num_scalar_prefetch=0,
            grid=(B // block_b,),
            in_specs=[
                pl.BlockSpec((block_b, T, C), lambda b: (b, 0, 0)),  # x rows (bf16)
                pl.BlockSpec((C, 3 * P), lambda b: (0, 0)),          # fused W (bf16)
            ],
            out_specs=pl.BlockSpec((block_b, T, H), lambda b: (b, 0, 0)),
        ),
        compiler_params=pltpu.CompilerParams(
            dimension_semantics=("parallel",),
        ),
    )(x_bf16, w_qkv)


def reference_forward(x, wq, wk, wv):
    """Pure-JAX f32 reference mirroring the PyTorch module."""
    B, T, C = x.shape
    q = x @ wq
    k = x @ wk
    v = x @ wv
    wei = (q @ jnp.swapaxes(k, -2, -1)) * (C ** -0.5)
    tril = jnp.tril(jnp.ones((T, T), dtype=bool))
    wei = jnp.where(tril, wei, -jnp.inf)
    wei = jax.nn.softmax(wei, axis=-1)
    return wei @ v


if __name__ == "__main__":
    key = jax.random.PRNGKey(0)
    k_x, k_q, k_k, k_v = jax.random.split(key, 4)

    B, T, C, H = 16, 64, N_EMBD, HEAD_SIZE

    x = jax.random.normal(k_x, (B, T, C), dtype=jnp.float32)

    # Deterministic Linear(no-bias) init, U(-1/sqrt(C), 1/sqrt(C)) like PyTorch.
    bound = 1.0 / (C ** 0.5)
    wq = jax.random.uniform(k_q, (C, H), jnp.float32, -bound, bound)
    wk = jax.random.uniform(k_k, (C, H), jnp.float32, -bound, bound)
    wv = jax.random.uniform(k_v, (C, H), jnp.float32, -bound, bound)

    out = jax.block_until_ready(head_forward(x, wq, wk, wv))
    ref = reference_forward(x, wq, wk, wv)

    assert out.shape == (B, T, H)
    # bf16 inputs to the MXU -> loosened tolerance vs the pure-f32 reference.
    err = float(jnp.max(jnp.abs(out - ref)))
    assert jnp.allclose(out, ref, atol=2e-2, rtol=2e-2), \
        f"mismatch vs reference (max abs err {err})"

    print("KERNEL_OK")
</pallas_src>

<mosaic_0001>
module attributes {stable_mosaic.version = 11 : i64} {
  func.func @head_kernel(%arg0: i32, %arg1: memref<4x64x384xbf16, #tpu.memory_space<vmem>>, %arg2: memref<384x384xbf16, #tpu.memory_space<vmem>>, %arg3: memref<4x64x64xf32, #tpu.memory_space<vmem>>) attributes {dimension_semantics = [#tpu.dimension_semantics<parallel>], iteration_bounds = array<i64: 4>, scalar_prefetch = 0 : i64, scratch_operands = 0 : i64, tpu.core_type = #tpu.core_type<tc>, window_params = [{transform_indices = @transform_0, window_bounds = array<i64: 4, 64, 384>}, {pipeline_mode = #tpu.pipeline_mode<synchronous>, transform_indices = @transform_1, window_bounds = array<i64: 384, 384>}, {transform_indices = @transform_2, window_bounds = array<i64: 4, 64, 64>}]} {
    %c0 = arith.constant 0 : index
    %c0_0 = arith.constant 0 : index
    %c0_1 = arith.constant 0 : index
    %0 = vector.load %arg1[%c0, %c0_0, %c0_1] : memref<4x64x384xbf16, #tpu.memory_space<vmem>>, vector<4x64x384xbf16>
    %1 = vector.shape_cast %0 : vector<4x64x384xbf16> to vector<256x384xbf16>
    %c0_2 = arith.constant 0 : index
    %c0_3 = arith.constant 0 : index
    %2 = vector.load %arg2[%c0_2, %c0_3] : memref<384x384xbf16, #tpu.memory_space<vmem>>, vector<384x384xbf16>
    %cst = arith.constant dense<0.000000e+00> : vector<256x384xf32>
    %3 = tpu.matmul %1, %2, %cst {dimension_numbers = #tpu.dot_dimension_numbers<[1], [0], [0], [1], [0, 0, 1, 1], [], []>} : vector<256x384xbf16>, vector<384x384xbf16>, vector<256x384xf32> -> vector<256x384xf32>
    %4 = vector.shape_cast %3 : vector<256x384xf32> to vector<4x64x384xf32>
    %5 = vector.extract_strided_slice %4 {offsets = [0, 0, 0], sizes = [4, 64, 128], strides = [1, 1, 1]} : vector<4x64x384xf32> to vector<4x64x128xf32>
    %6 = arith.truncf %5 : vector<4x64x128xf32> to vector<4x64x128xbf16>
    %7 = vector.extract_strided_slice %4 {offsets = [0, 0, 128], sizes = [4, 64, 128], strides = [1, 1, 1]} : vector<4x64x384xf32> to vector<4x64x128xf32>
    %8 = arith.truncf %7 : vector<4x64x128xf32> to vector<4x64x128xbf16>
    %9 = vector.extract_strided_slice %4 {offsets = [0, 0, 256], sizes = [4, 64, 128], strides = [1, 1, 1]} : vector<4x64x384xf32> to vector<4x64x128xf32>
    %10 = arith.truncf %9 : vector<4x64x128xf32> to vector<4x64x128xbf16>
    %cst_4 = arith.constant dense<0.000000e+00> : vector<4x64x64xf32>
    %11 = tpu.matmul %6, %8, %cst_4 {dimension_numbers = #tpu.dot_dimension_numbers<[2], [2], [1], [1], [0, 0, 0, 1, 1, 1], [0], [0]>} : vector<4x64x128xbf16>, vector<4x64x128xbf16>, vector<4x64x64xf32> -> vector<4x64x64xf32>
    %12 = tpu.iota {dimensions = array<i32: 0>} : vector<64x64xi32>
    %13 = tpu.iota {dimensions = array<i32: 1>} : vector<64x64xi32>
    %14 = arith.cmpi sle, %13, %12 : vector<64x64xi32>
    %15 = vector.shape_cast %14 : vector<64x64xi1> to vector<1x64x64xi1>
    %cst_5 = arith.constant -1.000000e+30 : f32
    %16 = vector.shape_cast %15 : vector<1x64x64xi1> to vector<1x64x64xi1>
    %17 = vector.broadcast %16 : vector<1x64x64xi1> to vector<4x64x64xi1>
    %18 = vector.broadcast %cst_5 : f32 to vector<4x64x64xf32>
    %19 = arith.select %17, %11, %18 : vector<4x64x64xi1>, vector<4x64x64xf32>
    %cst_6 = arith.constant dense<0xFF800000> : vector<4x64xf32>
    %20 = vector.multi_reduction <maximumf>, %19, %cst_6 [2] : vector<4x64x64xf32> to vector<4x64xf32>
    %21 = vector.shape_cast %20 : vector<4x64xf32> to vector<4x64x1xf32>
    %22 = vector.broadcast %21 : vector<4x64x1xf32> to vector<4x64x64xf32>
    %23 = arith.subf %19, %22 : vector<4x64x64xf32>
    %24 = math.exp %23 : vector<4x64x64xf32>
    %cst_7 = arith.constant dense<0.000000e+00> : vector<4x64xf32>
    %25 = vector.multi_reduction <add>, %24, %cst_7 [2] : vector<4x64x64xf32> to vector<4x64xf32>
    %26 = vector.shape_cast %25 : vector<4x64xf32> to vector<4x64x1xf32>
    %27 = arith.truncf %24 : vector<4x64x64xf32> to vector<4x64x64xbf16>
    %cst_8 = arith.constant dense<0.000000e+00> : vector<4x64x128xf32>
    %28 = tpu.matmul %27, %10, %cst_8 {dimension_numbers = #tpu.dot_dimension_numbers<[2], [1], [1], [2], [0, 0, 0, 1, 1, 2], [0], [0]>} : vector<4x64x64xbf16>, vector<4x64x128xbf16>, vector<4x64x128xf32> -> vector<4x64x128xf32>
    %29 = vector.extract_strided_slice %28 {offsets = [0, 0, 0], sizes = [4, 64, 64], strides = [1, 1, 1]} : vector<4x64x128xf32> to vector<4x64x64xf32>
    %30 = tpu.reciprocal %26 {approx = true} : vector<4x64x1xf32> -> vector<4x64x1xf32>
    %31 = vector.broadcast %30 : vector<4x64x1xf32> to vector<4x64x64xf32>
    %32 = arith.mulf %29, %31 : vector<4x64x64xf32>
    %c0_9 = arith.constant 0 : index
    %c0_10 = arith.constant 0 : index
    %c0_11 = arith.constant 0 : index
    %33 = vector.load %arg3[%c0_9, %c0_10, %c0_11] : memref<4x64x64xf32, #tpu.memory_space<vmem>>, vector<4x64x64xf32>
    tpu.vector_store %arg3[%c0_9, %c0_10, %c0_11], %32 {strides = array<i32>} : memref<4x64x64xf32, #tpu.memory_space<vmem>>, vector<4x64x64xf32>,
    return
  }
  func.func @transform_0(%arg0: i32) -> (i32, i32, i32) {
    %c0_i32 = arith.constant 0 : i32
    %c0_i32_0 = arith.constant 0 : i32
    %c0_i32_1 = arith.constant 0 : i32
    return %arg0, %c0_i32, %c0_i32_0 : i32, i32, i32
  }
  func.func @transform_1(%arg0: i32) -> (i32, i32) {
    %c0_i32 = arith.constant 0 : i32
    %c0_i32_0 = arith.constant 0 : i32
    %c0_i32_1 = arith.constant 0 : i32
    return %c0_i32, %c0_i32_0 : i32, i32
  }
  func.func @transform_2(%arg0: i32) -> (i32, i32, i32) {
    %c0_i32 = arith.constant 0 : i32
    %c0_i32_0 = arith.constant 0 : i32
    %c0_i32_1 = arith.constant 0 : i32
    return %arg0, %c0_i32, %c0_i32_0 : i32, i32, i32
  }
}

</mosaic_0001>

<llo_original>
// kernel: tpu_custom_call.1
$region0: #{tpu_custom_call.1}
  #allocation0 [shape = 'u32[]', space=smem, size = 0x4, offset = 0x4, fixed_abs, tag = 'smem constant byte address 0x4 - core index']
  #allocation1 [shape = 'u32[144,128]{1,0:T(1,128)}', space=vmem, size = 0x12000, scoped, tag = 'internal scratch']
  %s0 = inlined_call_operand.hbm [shape: bf16[16,64,384], index: 0, kind: input, shape index: {}]
  %s1 = inlined_call_operand.hbm [shape: bf16[384,384], index: 1, kind: input, shape index: {}]
  %s2 = inlined_call_operand.hbm [shape: f32[16,64,64], index: 2, kind: output, shape index: {}]
  %s3 = sld [smem:[#allocation0]]
  $region49: #{tpu_custom_call.1} parent=0
    _
  %s5 = ssub.s32 1, %s3
  %s6 = scalar_select 0, %s5, %s3
  $region1: #{tpu_custom_call.1} parent=0
    #allocation2 [shape = 'u8[393216]{0}', space=vmem, size = 0x60000, scoped, tag = 'input window, operand 0']
    #allocation3 [shape = 's32[2]{0}', space=sflag, size = 0x8, scoped, tag = 'scoped memory for tpu_custom_call.1']
    #allocation4 [shape = 's32[2]{0}', space=sflag, size = 0x8, scoped, tag = 'scoped memory for tpu_custom_call.1']
    #allocation5 [shape = 'u8[294912]{0}', space=vmem, size = 0x48000, scoped, tag = 'input window, operand 1, single buffered']
    #allocation6 [shape = 's32[1]{0}', space=sflag, size = 0x4, scoped, tag = 'scoped memory for tpu_custom_call.1']
    #allocation7 [shape = 'u8[262144]{0}', space=vmem, size = 0x40000, scoped, tag = 'output window, operand 0']
    %7 = vsyncpa [#allocation3], 0
    %s8 = scalar_lea.sflag [#allocation3], 1
    %9 = vsyncpa %s8, 0
    %10 = vsyncpa [#allocation6], 0
    %11 = vsyncpa [#allocation4], 0
    %s12 = scalar_lea.sflag [#allocation4], 1
    %13 = vsyncpa %s12, 0
    loop: start=0, step=1, limit=6
    $region2: #{tpu_custom_call.1} parent=1 // loop_pre_header
      _
    $region3: #{tpu_custom_call.1} parent=1 // loop_header
      %s15 = sphi 0, %s19
      %p16 = scmp.ge.s32.totalorder %s15, 6
      %s25 = sphi 0, %s27
      %s28 = sphi 0, %s25
      %s29 = sphi 0, %s28
      %s45 = sphi 0, %s29
      %s49 = sphi 0, %s49
      %s51 = sphi 0, %s49
      %s52 = sphi 0, %s51
      %s66 = sphi 0, %s52
      %s72 = sphi 0, %s74
      %s75 = sphi 0, %s72
      %s76 = sphi 0, %s75
      %s92 = sphi 0, %s76
    $region4: #{tpu_custom_call.1} parent=1 // loop_header_branch
      %18 = sbr.rel (%p16) target = $region8
    $region5: #{tpu_custom_call.1} parent=1 // loop_body
      %s20 = ssub.s32 %s15, 1
      %s21 = ssub.s32 %s15, 2
      %s22 = sadd.s32 %s15, 1
      %s23 = ssub.s32 %s15, %s22
      %p24 = scmp.eq.s32.totalorder %s23, 0
      %s26 = sadd.s32 %s25, 1
      %s27 = scalar_select %p24, %s25, %s26
      %p30 = pneg %p24
      %p31 = scmp.eq.s32.totalorder %s15, 3
      %p32 = por %p30, %p31
      %p33 = scmp.ne.s32.totalorder %s25, %s28
      %p34 = scmp.eq.s32.totalorder %s15, 0
      %p35 = por %p33, %p34
      %p36 = scmp.ne.s32.totalorder %s25, %s28
      %p37 = scmp.eq.s32.totalorder %s20, 3
      %p38 = por %p36, %p37
      %p39 = scmp.ne.s32.totalorder %s28, %s29
      %p40 = scmp.eq.s32.totalorder %s20, 0
      %p41 = por %p39, %p40
      %p42 = scmp.ne.s32.totalorder %s28, %s29
      %p43 = scmp.eq.s32.totalorder %s21, 3
      %p44 = por %p42, %p43
      %p46 = scmp.ne.s32.totalorder %s29, %s45
      %p47 = scmp.eq.s32.totalorder %s21, 0
      %p48 = por %p46, %p47
      %s50 = sadd.s32 %s49, 1
      %p53 = scmp.eq.s32.totalorder %s15, 3
      %p54 = scmp.ne.s32.totalorder %s49, %s51
      %p55 = scmp.eq.s32.totalorder %s15, 0
      %p56 = por %p54, %p55
      %p57 = scmp.ne.s32.totalorder %s49, %s51
      %p58 = scmp.eq.s32.totalorder %s20, 3
      %p59 = por %p57, %p58
      %p60 = scmp.ne.s32.totalorder %s51, %s52
      %p61 = scmp.eq.s32.totalorder %s20, 0
      %p62 = por %p60, %p61
      %p63 = scmp.ne.s32.totalorder %s51, %s52
      %p64 = scmp.eq.s32.totalorder %s21, 3
      %p65 = por %p63, %p64
      %p67 = scmp.ne.s32.totalorder %s52, %s66
      %p68 = scmp.eq.s32.totalorder %s21, 0
      %p69 = por %p67, %p68
      %s70 = ssub.s32 %s15, %s22
      %p71 = scmp.eq.s32.totalorder %s70, 0
      %s73 = sadd.s32 %s72, 1
      %s74 = scalar_select %p71, %s72, %s73
      %p77 = pneg %p71
      %p78 = scmp.eq.s32.totalorder %s15, 3
      %p79 = por %p77, %p78
      %p80 = scmp.ne.s32.totalorder %s72, %s75
      %p81 = scmp.eq.s32.totalorder %s15, 0
      %p82 = por %p80, %p81
      %p83 = scmp.ne.s32.totalorder %s72, %s75
      %p84 = scmp.eq.s32.totalorder %s20, 3
      %p85 = por %p83, %p84
      %p86 = scmp.ne.s32.totalorder %s75, %s76
      %p87 = scmp.eq.s32.totalorder %s20, 0
      %p88 = por %p86, %p87
      %p89 = scmp.ne.s32.totalorder %s75, %s76
      %p90 = scmp.eq.s32.totalorder %s21, 3
      %p91 = por %p89, %p90
      %p93 = scmp.ne.s32.totalorder %s76, %s92
      %p94 = scmp.eq.s32.totalorder %s21, 0
      %p95 = por %p93, %p94
      %p96 = scmp.le.s32.totalorder 1, %s15
      %p97 = scmp.lt.s32.totalorder %s15, 5
      %p98 = pnand %p96, %p97
      %p99 = pneg %p98
      // Predicated region
      $region9: #{tpu_custom_call.1} parent=5 // pred_check
        _
      $region10: #{tpu_custom_call.1} parent=5 // pred_check_branch
        %101 = sbr.rel (%p98) target = $region12
      $region11: #{tpu_custom_call.1} parent=5 // pred_region
        %s102 = ssub.s32 %s15, 1
        // Predicated region
        $region13: #{tpu_custom_call.1} parent=11 // pred_check
          %p103 = pneg %p62
        $region14: #{tpu_custom_call.1} parent=11 // pred_check_branch
          %105 = sbr.rel (%p103) target = $region16
        $region15: #{tpu_custom_call.1} parent=11 // pred_region
          %s107 = ssub.s32 9216, 9216
          %108 = vsyncadd [#allocation6], %s107
          %s109 = sshll.u32 [#allocation5], 4
          %s110 = int_to_ptr.vmem [resolvable:$true] %s109
          %115 = dma.hbm_to_vmem [thread:$0]  %s1, 9216, %s110, [#allocation6], 192, 192, 12
        $region16: #{tpu_custom_call.1} parent=11 // pred_fallthru
          _
      $region12: #{tpu_custom_call.1} parent=5 // pred_fallthru
        _
      %p116 = scmp.lt.s32.totalorder %s15, 4
      // Predicated region
      $region17: #{tpu_custom_call.1} parent=5 // pred_check
        %p117 = pneg %p116
      $region18: #{tpu_custom_call.1} parent=5 // pred_check_branch
        %119 = sbr.rel (%p117) target = $region20
      $region19: #{tpu_custom_call.1} parent=5 // pred_region
        // Predicated region
        $region21: #{tpu_custom_call.1} parent=19 // pred_check
          %p120 = pneg %p35
        $region22: #{tpu_custom_call.1} parent=19 // pred_check_branch
          %122 = sbr.rel (%p120) target = $region24
        $region23: #{tpu_custom_call.1} parent=19 // pred_region
          %s123 = sand.u32 %s25, 1
          %s124 = scalar_lea.sflag [#allocation3], %s123
          %s125 = sand.u32 %s25, 1
          %s126 = smul.addr %s125, 384
          %s127 = scalar_lea.vmem [#allocation2], %s126
          %s128 = smul.u32 4, %s15
          %s130 = ssub.s32 6144, 6144
          %131 = vsyncadd %s124, %s130
          %s132 = smul.addr %s128, 24
          %s133 = smul.addr %s132, 64
          %s134 = scalar_lea.hbm %s0, %s133
          %s135 = sshll.u32 %s127, 4
          %s136 = int_to_ptr.vmem [resolvable:$true] %s135
          %141 = dma.hbm_to_vmem [thread:$0]  %s134, 6144, %s136, %s124, 192, 192, 12
        $region24: #{tpu_custom_call.1} parent=19 // pred_fallthru
          _
      $region20: #{tpu_custom_call.1} parent=5 // pred_fallthru
        _
      %p142 = scmp.le.s32.totalorder 1, %s15
      %p143 = scmp.lt.s32.totalorder %s15, 5
      %p144 = pnand %p142, %p143
      %p145 = pneg %p144
      // Predicated region
      $region25: #{tpu_custom_call.1} parent=5 // pred_check
        _
      $region26: #{tpu_custom_call.1} parent=5 // pred_check_branch
        %147 = sbr.rel (%p144) target = $region28
      $region27: #{tpu_custom_call.1} parent=5 // pred_region
        %s148 = ssub.s32 %s15, 1
        %s149 = sand.u32 %s28, 1
        %s150 = scalar_lea.sflag [#allocation3], %s149
        %s151 = sand.u32 %s28, 1
        %s152 = smul.addr %s151, 384
        %s153 = scalar_lea.vmem [#allocation2], %s152
        // Predicated region
        $region29: #{tpu_custom_call.1} parent=27 // pred_check
          %p154 = pneg %p41
        $region30: #{tpu_custom_call.1} parent=27 // pred_check_branch
          %156 = sbr.rel (%p154) target = $region32
        $region31: #{tpu_custom_call.1} parent=27 // pred_region
          %157 = dma.done %s150, 6144
        $region32: #{tpu_custom_call.1} parent=27 // pred_fallthru
          _
        // Predicated region
        $region33: #{tpu_custom_call.1} parent=27 // pred_check
          %p158 = pneg %p62
        $region34: #{tpu_custom_call.1} parent=27 // pred_check_branch
          %160 = sbr.rel (%p158) target = $region36
        $region35: #{tpu_custom_call.1} parent=27 // pred_region
          %161 = dma.done [#allocation6], 9216
        $region36: #{tpu_custom_call.1} parent=27 // pred_fallthru
          _
        %s162 = sand.u32 %s28, 1
        %s163 = scalar_lea.sflag [#allocation3], %s162
        %s164 = sand.u32 %s28, 1
        %s165 = smul.addr %s164, 384
        %s166 = scalar_lea.vmem [#allocation2], %s165
        %p167 = pneg %p41
        %p168 = pneg %p38
        %p169 = pneg %p62
        %p170 = pneg %p59
        %p171 = pneg %p88
        %p172 = pneg %p85
        %s173 = sand.u32 %s75, 1
        %s174 = scalar_lea.sflag [#allocation4], %s173
        %s175 = sand.u32 %s75, 1
        %s176 = smul.addr %s175, 256
        %s177 = scalar_lea.vmem [#allocation7], %s176
        %s178 = smul.u32 4, %s20
        %s179 = smul.u32 4, %s20
        %v181 = vld [vmem:[%s153] sm:$0xff]
        %v182 = vld [vmem:[%s153 + $0x8] sm:$0xf]
        %v183 = vld [vmem:[%s153 + $0xc] sm:$0xff]
        %v184 = vld [vmem:[%s153 + $0x14] sm:$0xf]
        %v185 = vld [vmem:[%s153 + $0x18] sm:$0xff]
        %v186 = vld [vmem:[%s153 + $0x20] sm:$0xf]
        %v187 = vld [vmem:[%s153 + $0x24] sm:$0xff]
        %v188 = vld [vmem:[%s153 + $0x2c] sm:$0xf]
        %v189 = vld [vmem:[%s153 + $0x30] sm:$0xff]
        %v190 = vld [vmem:[%s153 + $0x38] sm:$0xf]
        %v191 = vld [vmem:[%s153 + $0x3c] sm:$0xff]
        %v192 = vld [vmem:[%s153 + $0x44] sm:$0xf]
        %v193 = vld [vmem:[%s153 + $0x48] sm:$0xff]
        %v194 = vld [vmem:[%s153 + $0x50] sm:$0xf]
        %v195 = vld [vmem:[%s153 + $0x54] sm:$0xff]
        %v196 = vld [vmem:[%s153 + $0x5c] sm:$0xf]
        %v197 = vld [vmem:[%s153 + $0x60] sm:$0xff]
        %v198 = vld [vmem:[%s153 + $0x68] sm:$0xf]
        %v199 = vld [vmem:[%s153 + $0x6c] sm:$0xff]
        %v200 = vld [vmem:[%s153 + $0x74] sm:$0xf]
        %v201 = vld [vmem:[%s153 + $0x78] sm:$0xff]
        %v202 = vld [vmem:[%s153 + $0x80] sm:$0xf]
        %v203 = vld [vmem:[%s153 + $0x84] sm:$0xff]
        %v204 = vld [vmem:[%s153 + $0x8c] sm:$0xf]
        %v205 = vld [vmem:[%s153 + $0x90] sm:$0xff]
        %v206 = vld [vmem:[%s153 + $0x98] sm:$0xf]
        %v207 = vld [vmem:[%s153 + $0x9c] sm:$0xff]
        %v208 = vld [vmem:[%s153 + $0xa4] sm:$0xf]
        %v209 = vld [vmem:[%s153 + $0xa8] sm:$0xff]
        %v210 = vld [vmem:[%s153 + $0xb0] sm:$0xf]
        %v211 = vld [vmem:[%s153 + $0xb4] sm:$0xff]
        %v212 = vld [vmem:[%s153 + $0xbc] sm:$0xf]
        %v213 = vld [vmem:[%s153 + $0xc0] sm:$0xff]
        %v214 = vld [vmem:[%s153 + $0xc8] sm:$0xf]
        %v215 = vld [vmem:[%s153 + $0xcc] sm:$0xff]
        %v216 = vld [vmem:[%s153 + $0xd4] sm:$0xf]
        %v217 = vld [vmem:[%s153 + $0xd8] sm:$0xff]
        %v218 = vld [vmem:[%s153 + $0xe0] sm:$0xf]
        %v219 = vld [vmem:[%s153 + $0xe4] sm:$0xff]
        %v220 = vld [vmem:[%s153 + $0xec] sm:$0xf]
        %v221 = vld [vmem:[%s153 + $0xf0] sm:$0xff]
        %v222 = vld [vmem:[%s153 + $0xf8] sm:$0xf]
        %v223 = vld [vmem:[%s153 + $0xfc] sm:$0xff]
        %v224 = vld [vmem:[%s153 + $0x104] sm:$0xf]
        %v225 = vld [vmem:[%s153 + $0x108] sm:$0xff]
        %v226 = vld [vmem:[%s153 + $0x110] sm:$0xf]
        %v227 = vld [vmem:[%s153 + $0x114] sm:$0xff]
        %v228 = vld [vmem:[%s153 + $0x11c] sm:$0xf]
        %v229 = vld [vmem:[%s153 + $0x120] sm:$0xff]
        %v230 = vld [vmem:[%s153 + $0x128] sm:$0xf]
        %v231 = vld [vmem:[%s153 + $0x12c] sm:$0xff]
        %v232 = vld [vmem:[%s153 + $0x134] sm:$0xf]
        %v233 = vld [vmem:[%s153 + $0x138] sm:$0xff]
        %v234 = vld [vmem:[%s153 + $0x140] sm:$0xf]
        %v235 = vld [vmem:[%s153 + $0x144] sm:$0xff]
        %v236 = vld [vmem:[%s153 + $0x14c] sm:$0xf]
        %v237 = vld [vmem:[%s153 + $0x150] sm:$0xff]
        %v238 = vld [vmem:[%s153 + $0x158] sm:$0xf]
        %v239 = vld [vmem:[%s153 + $0x15c] sm:$0xff]
        %v240 = vld [vmem:[%s153 + $0x164] sm:$0xf]
        %v241 = vld [vmem:[%s153 + $0x168] sm:$0xff]
        %v242 = vld [vmem:[%s153 + $0x170] sm:$0xf]
        %v243 = vld [vmem:[%s153 + $0x174] sm:$0xff]
        %v244 = vld [vmem:[%s153 + $0x17c] sm:$0xf]
        %v245 = vld [vmem:[#allocation5] sm:$0xff]
        %v246 = vld [vmem:[#allocation5 + $0x8] sm:$0xf]
        %v247 = vld [vmem:[#allocation5 + $0xc] sm:$0xff]
        %v248 = vld [vmem:[#allocation5 + $0x14] sm:$0xf]
        %v249 = vld [vmem:[#allocation5 + $0x18] sm:$0xff]
        %v250 = vld [vmem:[#allocation5 + $0x20] sm:$0xf]
        %v251 = vld [vmem:[#allocation5 + $0x24] sm:$0xff]
        %v252 = vld [vmem:[#allocation5 + $0x2c] sm:$0xf]
        %v253 = vld [vmem:[#allocation5 + $0x30] sm:$0xff]
        %v254 = vld [vmem:[#allocation5 + $0x38] sm:$0xf]
        %v255 = vld [vmem:[#allocation5 + $0x3c] sm:$0xff]
        %v256 = vld [vmem:[#allocation5 + $0x44] sm:$0xf]
        %v257 = vld [vmem:[#allocation5 + $0x48] sm:$0xff]
        %v258 = vld [vmem:[#allocation5 + $0x50] sm:$0xf]
        %v259 = vld [vmem:[#allocation5 + $0x54] sm:$0xff]
        %v260 = vld [vmem:[#allocation5 + $0x5c] sm:$0xf]
        %v261 = vld [vmem:[#allocation5 + $0x60] sm:$0xff]
        %v262 = vld [vmem:[#allocation5 + $0x68] sm:$0xf]
        %v263 = vld [vmem:[#allocation5 + $0x6c] sm:$0xff]
        %v264 = vld [vmem:[#allocation5 + $0x74] sm:$0xf]
        %v265 = vld [vmem:[#allocation5 + $0x78] sm:$0xff]
        %v266 = vld [vmem:[#allocation5 + $0x80] sm:$0xf]
        %v267 = vld [vmem:[#allocation5 + $0x84] sm:$0xff]
        %v268 = vld [vmem:[#allocation5 + $0x8c] sm:$0xf]
        %v269 = vld [vmem:[#allocation5 + $0x90] sm:$0xff]
        %v270 = vld [vmem:[#allocation5 + $0x98] sm:$0xf]
        %v271 = vld [vmem:[#allocation5 + $0x9c] sm:$0xff]
        %v272 = vld [vmem:[#allocation5 + $0xa4] sm:$0xf]
        %v273 = vld [vmem:[#allocation5 + $0xa8] sm:$0xff]
        %v274 = vld [vmem:[#allocation5 + $0xb0] sm:$0xf]
        %v275 = vld [vmem:[#allocation5 + $0xb4] sm:$0xff]
        %v276 = vld [vmem:[#allocation5 + $0xbc] sm:$0xf]
        %v277 = vld [vmem:[#allocation5 + $0xc0] sm:$0xff]
        %v278 = vld [vmem:[#allocation5 + $0xc8] sm:$0xf]
        %v279 = vld [vmem:[#allocation5 + $0xcc] sm:$0xff]
        %v280 = vld [vmem:[#allocation5 + $0xd4] sm:$0xf]
        %v281 = vld [vmem:[#allocation5 + $0xd8] sm:$0xff]
        %v282 = vld [vmem:[#allocation5 + $0xe0] sm:$0xf]
        %v283 = vld [vmem:[#allocation5 + $0xe4] sm:$0xff]
        %v284 = vld [vmem:[#allocation5 + $0xec] sm:$0xf]
        %v285 = vld [vmem:[#allocation5 + $0xf0] sm:$0xff]
        %v286 = vld [vmem:[#allocation5 + $0xf8] sm:$0xf]
        %v287 = vld [vmem:[#allocation5 + $0xfc] sm:$0xff]
        %v288 = vld [vmem:[#allocation5 + $0x104] sm:$0xf]
        %v289 = vld [vmem:[#allocation5 + $0x108] sm:$0xff]
        %v290 = vld [vmem:[#allocation5 + $0x110] sm:$0xf]
        %v291 = vld [vmem:[#allocation5 + $0x114] sm:$0xff]
        %v292 = vld [vmem:[#allocation5 + $0x11c] sm:$0xf]
        %v293 = vld [vmem:[#allocation5 + $0x120] sm:$0xff]
        %v294 = vld [vmem:[#allocation5 + $0x128] sm:$0xf]
        %v295 = vld [vmem:[#allocation5 + $0x12c] sm:$0xff]
        %v296 = vld [vmem:[#allocation5 + $0x134] sm:$0xf]
        %v297 = vld [vmem:[#allocation5 + $0x138] sm:$0xff]
        %v298 = vld [vmem:[#allocation5 + $0x140] sm:$0xf]
        %v299 = vld [vmem:[#allocation5 + $0x144] sm:$0xff]
        %v300 = vld [vmem:[#allocation5 + $0x14c] sm:$0xf]
        %v301 = vld [vmem:[#allocation5 + $0x150] sm:$0xff]
        %v302 = vld [vmem:[#allocation5 + $0x158] sm:$0xf]
        %v303 = vld [vmem:[#allocation5 + $0x15c] sm:$0xff]
        %v304 = vld [vmem:[#allocation5 + $0x164] sm:$0xf]
        %v305 = vld [vmem:[#allocation5 + $0x168] sm:$0xff]
        %v306 = vld [vmem:[#allocation5 + $0x170] sm:$0xf]
        %v307 = vld [vmem:[#allocation5 + $0x174] sm:$0xff]
        %v308 = vld [vmem:[#allocation5 + $0x17c] sm:$0xf]
        %v309 = vld [vmem:[#allocation5 + $0x180] sm:$0xff]
        %v310 = vld [vmem:[#allocation5 + $0x188] sm:$0xf]
        %v311 = vld [vmem:[#allocation5 + $0x18c] sm:$0xff]
        %v312 = vld [vmem:[#allocation5 + $0x194] sm:$0xf]
        %v313 = vld [vmem:[#allocation5 + $0x198] sm:$0xff]
        %v314 = vld [vmem:[#allocation5 + $0x1a0] sm:$0xf]
        %v315 = vld [vmem:[#allocation5 + $0x1a4] sm:$0xff]
        %v316 = vld [vmem:[#allocation5 + $0x1ac] sm:$0xf]
        %v317 = vld [vmem:[#allocation5 + $0x1b0] sm:$0xff]
        %v318 = vld [vmem:[#allocation5 + $0x1b8] sm:$0xf]
        %v319 = vld [vmem:[#allocation5 + $0x1bc] sm:$0xff]
        %v320 = vld [vmem:[#allocation5 + $0x1c4] sm:$0xf]
        %v321 = vld [vmem:[#allocation5 + $0x1c8] sm:$0xff]
        %v322 = vld [vmem:[#allocation5 + $0x1d0] sm:$0xf]
        %v323 = vld [vmem:[#allocation5 + $0x1d4] sm:$0xff]
        %v324 = vld [vmem:[#allocation5 + $0x1dc] sm:$0xf]
        %v325 = vld [vmem:[#allocation5 + $0x1e0] sm:$0xff]
        %v326 = vld [vmem:[#allocation5 + $0x1e8] sm:$0xf]
        %v327 = vld [vmem:[#allocation5 + $0x1ec] sm:$0xff]
        %v328 = vld [vmem:[#allocation5 + $0x1f4] sm:$0xf]
        %v329 = vld [vmem:[#allocation5 + $0x1f8] sm:$0xff]
        %v330 = vld [vmem:[#allocation5 + $0x200] sm:$0xf]
        %v331 = vld [vmem:[#allocation5 + $0x204] sm:$0xff]
        %v332 = vld [vmem:[#allocation5 + $0x20c] sm:$0xf]
        %v333 = vld [vmem:[#allocation5 + $0x210] sm:$0xff]
        %v334 = vld [vmem:[#allocation5 + $0x218] sm:$0xf]
        %v335 = vld [vmem:[#allocation5 + $0x21c] sm:$0xff]
        %v336 = vld [vmem:[#allocation5 + $0x224] sm:$0xf]
        %v337 = vld [vmem:[#allocation5 + $0x228] sm:$0xff]
        %v338 = vld [vmem:[#allocation5 + $0x230] sm:$0xf]
        %v339 = vld [vmem:[#allocation5 + $0x234] sm:$0xff]
        %v340 = vld [vmem:[#allocation5 + $0x23c] sm:$0xf]
        %v405 = vunpack.c.l.b16 %v181
        %v406 = vunpack.c.h.b16 %v181
        %v407 = vunpack.c.l.b16 %v182
        %v408 = vunpack.c.l.b16 %v183
        %v409 = vunpack.c.h.b16 %v183
        %v410 = vunpack.c.l.b16 %v184
        %v411 = vunpack.c.l.b16 %v185
        %v412 = vunpack.c.h.b16 %v185
        %v413 = vunpack.c.l.b16 %v186
        %v414 = vunpack.c.l.b16 %v187
        %v415 = vunpack.c.h.b16 %v187
        %v416 = vunpack.c.l.b16 %v188
        %v417 = vunpack.c.l.b16 %v189
        %v418 = vunpack.c.h.b16 %v189
        %v419 = vunpack.c.l.b16 %v190
        %v420 = vunpack.c.l.b16 %v191
        %v421 = vunpack.c.h.b16 %v191
        %v422 = vunpack.c.l.b16 %v192
        %v423 = vunpack.c.l.b16 %v193
        %v424 = vunpack.c.h.b16 %v193
        %v425 = vunpack.c.l.b16 %v194
        %v426 = vunpack.c.l.b16 %v195
        %v427 = vunpack.c.h.b16 %v195
        %v428 = vunpack.c.l.b16 %v196
        %v429 = vunpack.c.l.b16 %v197
        %v430 = vunpack.c.h.b16 %v197
        %v431 = vunpack.c.l.b16 %v198
        %v432 = vunpack.c.l.b16 %v199
        %v433 = vunpack.c.h.b16 %v199
        %v434 = vunpack.c.l.b16 %v200
        %v435 = vunpack.c.l.b16 %v201
        %v436 = vunpack.c.h.b16 %v201
        %v437 = vunpack.c.l.b16 %v202
        %v438 = vunpack.c.l.b16 %v203
        %v439 = vunpack.c.h.b16 %v203
        %v440 = vunpack.c.l.b16 %v204
        %v441 = vunpack.c.l.b16 %v205
        %v442 = vunpack.c.h.b16 %v205
        %v443 = vunpack.c.l.b16 %v206
        %v444 = vunpack.c.l.b16 %v207
        %v445 = vunpack.c.h.b16 %v207
        %v446 = vunpack.c.l.b16 %v208
        %v447 = vunpack.c.l.b16 %v209
        %v448 = vunpack.c.h.b16 %v209
        %v449 = vunpack.c.l.b16 %v210
        %v450 = vunpack.c.l.b16 %v211
        %v451 = vunpack.c.h.b16 %v211
        %v452 = vunpack.c.l.b16 %v212
        %v453 = vunpack.c.l.b16 %v213
        %v454 = vunpack.c.h.b16 %v213
        %v455 = vunpack.c.l.b16 %v214
        %v456 = vunpack.c.l.b16 %v215
        %v457 = vunpack.c.h.b16 %v215
        %v458 = vunpack.c.l.b16 %v216
        %v459 = vunpack.c.l.b16 %v217
        %v460 = vunpack.c.h.b16 %v217
        %v461 = vunpack.c.l.b16 %v218
        %v462 = vunpack.c.l.b16 %v219
        %v463 = vunpack.c.h.b16 %v219
        %v464 = vunpack.c.l.b16 %v220
        %v465 = vunpack.c.l.b16 %v221
        %v466 = vunpack.c.h.b16 %v221
        %v467 = vunpack.c.l.b16 %v222
        %v468 = vunpack.c.l.b16 %v223
        %v469 = vunpack.c.h.b16 %v223
        %v470 = vunpack.c.l.b16 %v224
        %v471 = vunpack.c.l.b16 %v225
        %v472 = vunpack.c.h.b16 %v225
        %v473 = vunpack.c.l.b16 %v226
        %v474 = vunpack.c.l.b16 %v227
        %v475 = vunpack.c.h.b16 %v227
        %v476 = vunpack.c.l.b16 %v228
        %v477 = vunpack.c.l.b16 %v229
        %v478 = vunpack.c.h.b16 %v229
        %v479 = vunpack.c.l.b16 %v230
        %v480 = vunpack.c.l.b16 %v231
        %v481 = vunpack.c.h.b16 %v231
        %v482 = vunpack.c.l.b16 %v232
        %v483 = vunpack.c.l.b16 %v233
        %v484 = vunpack.c.h.b16 %v233
        %v485 = vunpack.c.l.b16 %v234
        %v486 = vunpack.c.l.b16 %v235
        %v487 = vunpack.c.h.b16 %v235
        %v488 = vunpack.c.l.b16 %v236
        %v489 = vunpack.c.l.b16 %v237
        %v490 = vunpack.c.h.b16 %v237
        %v491 = vunpack.c.l.b16 %v238
        %v492 = vunpack.c.l.b16 %v239
        %v493 = vunpack.c.h.b16 %v239
        %v494 = vunpack.c.l.b16 %v240
        %v495 = vunpack.c.l.b16 %v241
        %v496 = vunpack.c.h.b16 %v241
        %v497 = vunpack.c.l.b16 %v242
        %v498 = vunpack.c.l.b16 %v243
        %v499 = vunpack.c.h.b16 %v243
        %v500 = vunpack.c.l.b16 %v244
        %v501 = vpack.c.b16 %v408, %v405
        %v502 = vpack.c.b16 %v409, %v406
        %v503 = vpack.c.b16 %v410, %v407
        %v504 = vpack.c.b16 %v414, %v411
        %v505 = vpack.c.b16 %v415, %v412
        %v506 = vpack.c.b16 %v416, %v413
        %v507 = vpack.c.b16 %v420, %v417
        %v508 = vpack.c.b16 %v421, %v418
        %v509 = vpack.c.b16 %v422, %v419
        %v510 = vpack.c.b16 %v426, %v423
        %v511 = vpack.c.b16 %v427, %v424
        %v512 = vpack.c.b16 %v428, %v425
        %v513 = vpack.c.b16 %v432, %v429
        %v514 = vpack.c.b16 %v433, %v430
        %v515 = vpack.c.b16 %v434, %v431
        %v516 = vpack.c.b16 %v438, %v435
        %v517 = vpack.c.b16 %v439, %v436
        %v518 = vpack.c.b16 %v440, %v437
        %v519 = vpack.c.b16 %v444, %v441
        %v520 = vpack.c.b16 %v445, %v442
        %v521 = vpack.c.b16 %v446, %v443
        %v522 = vpack.c.b16 %v450, %v447
        %v523 = vpack.c.b16 %v451, %v448
        %v524 = vpack.c.b16 %v452, %v449
        %v525 = vpack.c.b16 %v456, %v453
        %v526 = vpack.c.b16 %v457, %v454
        %v527 = vpack.c.b16 %v458, %v455
        %v528 = vpack.c.b16 %v462, %v459
        %v529 = vpack.c.b16 %v463, %v460
        %v530 = vpack.c.b16 %v464, %v461
        %v531 = vpack.c.b16 %v468, %v465
        %v532 = vpack.c.b16 %v469, %v466
        %v533 = vpack.c.b16 %v470, %v467
        %v534 = vpack.c.b16 %v474, %v471
        %v535 = vpack.c.b16 %v475, %v472
        %v536 = vpack.c.b16 %v476, %v473
        %v537 = vpack.c.b16 %v480, %v477
        %v538 = vpack.c.b16 %v481, %v478
        %v539 = vpack.c.b16 %v482, %v479
        %v540 = vpack.c.b16 %v486, %v483
        %v541 = vpack.c.b16 %v487, %v484
        %v542 = vpack.c.b16 %v488, %v485
        %v543 = vpack.c.b16 %v492, %v489
        %v544 = vpack.c.b16 %v493, %v490
        %v545 = vpack.c.b16 %v494, %v491
        %v546 = vpack.c.b16 %v498, %v495
        %v547 = vpack.c.b16 %v499, %v496
        %v548 = vpack.c.b16 %v500, %v497
        %v693 = vunpack.c.l.b16 %v245
        %v694 = vunpack.c.h.b16 %v245
        %v695 = vunpack.c.l.b16 %v246
        %v696 = vunpack.c.l.b16 %v247
        %v697 = vunpack.c.h.b16 %v247
        %v698 = vunpack.c.l.b16 %v248
        %v699 = vunpack.c.l.b16 %v249
        %v700 = vunpack.c.h.b16 %v249
        %v701 = vunpack.c.l.b16 %v250
        %v702 = vunpack.c.l.b16 %v251
        %v703 = vunpack.c.h.b16 %v251
        %v704 = vunpack.c.l.b16 %v252
        %v705 = vunpack.c.l.b16 %v253
        %v706 = vunpack.c.h.b16 %v253
        %v707 = vunpack.c.l.b16 %v254
        %v708 = vunpack.c.l.b16 %v255
        %v709 = vunpack.c.h.b16 %v255
        %v710 = vunpack.c.l.b16 %v256
        %v711 = vunpack.c.l.b16 %v257
        %v712 = vunpack.c.h.b16 %v257
        %v713 = vunpack.c.l.b16 %v258
        %v714 = vunpack.c.l.b16 %v259
        %v715 = vunpack.c.h.b16 %v259
        %v716 = vunpack.c.l.b16 %v260
        %v717 = vunpack.c.l.b16 %v261
        %v718 = vunpack.c.h.b16 %v261
        %v719 = vunpack.c.l.b16 %v262
        %v720 = vunpack.c.l.b16 %v263
        %v721 = vunpack.c.h.b16 %v263
        %v722 = vunpack.c.l.b16 %v264
        %v723 = vunpack.c.l.b16 %v265
        %v724 = vunpack.c.h.b16 %v265
        %v725 = vunpack.c.l.b16 %v266
        %v726 = vunpack.c.l.b16 %v267
        %v727 = vunpack.c.h.b16 %v267
        %v728 = vunpack.c.l.b16 %v268
        %v729 = vunpack.c.l.b16 %v269
        %v730 = vunpack.c.h.b16 %v269
        %v731 = vunpack.c.l.b16 %v270
        %v732 = vunpack.c.l.b16 %v271
        %v733 = vunpack.c.h.b16 %v271
        %v734 = vunpack.c.l.b16 %v272
        %v735 = vunpack.c.l.b16 %v273
        %v736 = vunpack.c.h.b16 %v273
        %v737 = vunpack.c.l.b16 %v274
        %v738 = vunpack.c.l.b16 %v275
        %v739 = vunpack.c.h.b16 %v275
        %v740 = vunpack.c.l.b16 %v276
        %v741 = vunpack.c.l.b16 %v277
        %v742 = vunpack.c.h.b16 %v277
        %v743 = vunpack.c.l.b16 %v278
        %v744 = vunpack.c.l.b16 %v279
        %v745 = vunpack.c.h.b16 %v279
        %v746 = vunpack.c.l.b16 %v280
        %v747 = vunpack.c.l.b16 %v281
        %v748 = vunpack.c.h.b16 %v281
        %v749 = vunpack.c.l.b16 %v282
        %v750 = vunpack.c.l.b16 %v283
        %v751 = vunpack.c.h.b16 %v283
        %v752 = vunpack.c.l.b16 %v284
        %v753 = vunpack.c.l.b16 %v285
        %v754 = vunpack.c.h.b16 %v285
        %v755 = vunpack.c.l.b16 %v286
        %v756 = vunpack.c.l.b16 %v287
        %v757 = vunpack.c.h.b16 %v287
        %v758 = vunpack.c.l.b16 %v288
        %v759 = vunpack.c.l.b16 %v289
        %v760 = vunpack.c.h.b16 %v289
        %v761 = vunpack.c.l.b16 %v290
        %v762 = vunpack.c.l.b16 %v291
        %v763 = vunpack.c.h.b16 %v291
        %v764 = vunpack.c.l.b16 %v292
        %v765 = vunpack.c.l.b16 %v293
        %v766 = vunpack.c.h.b16 %v293
        %v767 = vunpack.c.l.b16 %v294
        %v768 = vunpack.c.l.b16 %v295
        %v769 = vunpack.c.h.b16 %v295
        %v770 = vunpack.c.l.b16 %v296
        %v771 = vunpack.c.l.b16 %v297
        %v772 = vunpack.c.h.b16 %v297
        %v773 = vunpack.c.l.b16 %v298
        %v774 = vunpack.c.l.b16 %v299
        %v775 = vunpack.c.h.b16 %v299
        %v776 = vunpack.c.l.b16 %v300
        %v777 = vunpack.c.l.b16 %v301
        %v778 = vunpack.c.h.b16 %v301
        %v779 = vunpack.c.l.b16 %v302
        %v780 = vunpack.c.l.b16 %v303
        %v781 = vunpack.c.h.b16 %v303
        %v782 = vunpack.c.l.b16 %v304
        %v783 = vunpack.c.l.b16 %v305
        %v784 = vunpack.c.h.b16 %v305
        %v785 = vunpack.c.l.b16 %v306
        %v786 = vunpack.c.l.b16 %v307
        %v787 = vunpack.c.h.b16 %v307
        %v788 = vunpack.c.l.b16 %v308
        %v789 = vunpack.c.l.b16 %v309
        %v790 = vunpack.c.h.b16 %v309
        %v791 = vunpack.c.l.b16 %v310
        %v792 = vunpack.c.l.b16 %v311
        %v793 = vunpack.c.h.b16 %v311
        %v794 = vunpack.c.l.b16 %v312
        %v795 = vunpack.c.l.b16 %v313
        %v796 = vunpack.c.h.b16 %v313
        %v797 = vunpack.c.l.b16 %v314
        %v798 = vunpack.c.l.b16 %v315
        %v799 = vunpack.c.h.b16 %v315
        %v800 = vunpack.c.l.b16 %v316
        %v801 = vunpack.c.l.b16 %v317
        %v802 = vunpack.c.h.b16 %v317
        %v803 = vunpack.c.l.b16 %v318
        %v804 = vunpack.c.l.b16 %v319
        %v805 = vunpack.c.h.b16 %v319
        %v806 = vunpack.c.l.b16 %v320
        %v807 = vunpack.c.l.b16 %v321
        %v808 = vunpack.c.h.b16 %v321
        %v809 = vunpack.c.l.b16 %v322
        %v810 = vunpack.c.l.b16 %v323
        %v811 = vunpack.c.h.b16 %v323
        %v812 = vunpack.c.l.b16 %v324
        %v813 = vunpack.c.l.b16 %v325
        %v814 = vunpack.c.h.b16 %v325
        %v815 = vunpack.c.l.b16 %v326
        %v816 = vunpack.c.l.b16 %v327
        %v817 = vunpack.c.h.b16 %v327
        %v818 = vunpack.c.l.b16 %v328
        %v819 = vunpack.c.l.b16 %v329
        %v820 = vunpack.c.h.b16 %v329
        %v821 = vunpack.c.l.b16 %v330
        %v822 = vunpack.c.l.b16 %v331
        %v823 = vunpack.c.h.b16 %v331
        %v824 = vunpack.c.l.b16 %v332
        %v825 = vunpack.c.l.b16 %v333
        %v826 = vunpack.c.h.b16 %v333
        %v827 = vunpack.c.l.b16 %v334
        %v828 = vunpack.c.l.b16 %v335
        %v829 = vunpack.c.h.b16 %v335
        %v830 = vunpack.c.l.b16 %v336
        %v831 = vunpack.c.l.b16 %v337
        %v832 = vunpack.c.h.b16 %v337
        %v833 = vunpack.c.l.b16 %v338
        %v834 = vunpack.c.l.b16 %v339
        %v835 = vunpack.c.h.b16 %v339
        %v836 = vunpack.c.l.b16 %v340
        %v837 = vpack.c.b16 %v696, %v693
        %v838 = vpack.c.b16 %v697, %v694
        %v839 = vpack.c.b16 %v698, %v695
        %v840 = vpack.c.b16 %v702, %v699
        %v841 = vpack.c.b16 %v703, %v700
        %v842 = vpack.c.b16 %v704, %v701
        %v843 = vpack.c.b16 %v708, %v705
        %v844 = vpack.c.b16 %v709, %v706
        %v845 = vpack.c.b16 %v710, %v707
        %v846 = vpack.c.b16 %v714, %v711
        %v847 = vpack.c.b16 %v715, %v712
        %v848 = vpack.c.b16 %v716, %v713
        %v849 = vpack.c.b16 %v720, %v717
        %v850 = vpack.c.b16 %v721, %v718
        %v851 = vpack.c.b16 %v722, %v719
        %v852 = vpack.c.b16 %v726, %v723
        %v853 = vpack.c.b16 %v727, %v724
        %v854 = vpack.c.b16 %v728, %v725
        %v855 = vpack.c.b16 %v732, %v729
        %v856 = vpack.c.b16 %v733, %v730
        %v857 = vpack.c.b16 %v734, %v731
        %v858 = vpack.c.b16 %v738, %v735
        %v859 = vpack.c.b16 %v739, %v736
        %v860 = vpack.c.b16 %v740, %v737
        %v861 = vpack.c.b16 %v744, %v741
        %v862 = vpack.c.b16 %v745, %v742
        %v863 = vpack.c.b16 %v746, %v743
        %v864 = vpack.c.b16 %v750, %v747
        %v865 = vpack.c.b16 %v751, %v748
        %v866 = vpack.c.b16 %v752, %v749
        %v867 = vpack.c.b16 %v756, %v753
        %v868 = vpack.c.b16 %v757, %v754
        %v869 = vpack.c.b16 %v758, %v755
        %v870 = vpack.c.b16 %v762, %v759
        %v871 = vpack.c.b16 %v763, %v760
        %v872 = vpack.c.b16 %v764, %v761
        %v873 = vpack.c.b16 %v768, %v765
        %v874 = vpack.c.b16 %v769, %v766
        %v875 = vpack.c.b16 %v770, %v767
        %v876 = vpack.c.b16 %v774, %v771
        %v877 = vpack.c.b16 %v775, %v772
        %v878 = vpack.c.b16 %v776, %v773
        %v879 = vpack.c.b16 %v780, %v777
        %v880 = vpack.c.b16 %v781, %v778
        %v881 = vpack.c.b16 %v782, %v779
        %v882 = vpack.c.b16 %v786, %v783
        %v883 = vpack.c.b16 %v787, %v784
        %v884 = vpack.c.b16 %v788, %v785
        %v885 = vpack.c.b16 %v792, %v789
        %v886 = vpack.c.b16 %v793, %v790
        %v887 = vpack.c.b16 %v794, %v791
        %v888 = vpack.c.b16 %v798, %v795
        %v889 = vpack.c.b16 %v799, %v796
        %v890 = vpack.c.b16 %v800, %v797
        %v891 = vpack.c.b16 %v804, %v801
        %v892 = vpack.c.b16 %v805, %v802
        %v893 = vpack.c.b16 %v806, %v803
        %v894 = vpack.c.b16 %v810, %v807
        %v895 = vpack.c.b16 %v811, %v808
        %v896 = vpack.c.b16 %v812, %v809
        %v897 = vpack.c.b16 %v816, %v813
        %v898 = vpack.c.b16 %v817, %v814
        %v899 = vpack.c.b16 %v818, %v815
        %v900 = vpack.c.b16 %v822, %v819
        %v901 = vpack.c.b16 %v823, %v820
        %v902 = vpack.c.b16 %v824, %v821
        %v903 = vpack.c.b16 %v828, %v825
        %v904 = vpack.c.b16 %v829, %v826
        %v905 = vpack.c.b16 %v830, %v827
        %v906 = vpack.c.b16 %v834, %v831
        %v907 = vpack.c.b16 %v835, %v832
        %v908 = vpack.c.b16 %v836, %v833
        %981 = vmatprep.subr.bf16.mxu0 %v838
        %982 = vmatpush1.bf16.msra.mxu0 %v837
        %983 = vmatprep.subr.bf16.mxu0 %v841
        %984 = vmatpush1.bf16.msra.mxu0 %v840
        %985 = vmatprep.subr.bf16.mxu0 %v844
        %986 = vmatpush1.bf16.msra.mxu0 %v843
        %987 = vmatprep.subr.bf16.mxu0 %v847
        %988 = vmatpush1.bf16.msra.mxu0 %v846
        %989 = vmatprep.subr.bf16.mxu0 %v850
        %990 = vmatpush1.bf16.msra.mxu0 %v849
        %991 = vmatprep.subr.bf16.mxu0 %v853
        %992 = vmatpush1.bf16.msra.mxu0 %v852
        %993 = vmatprep.subr.bf16.mxu0 %v856
        %994 = vmatpush1.bf16.msra.mxu0 %v855
        %995 = vmatprep.subr.bf16.mxu0 %v859
        %996 = vmatpush1.bf16.msra.mxu0 %v858
        %997 = vmatprep.subr.bf16.mxu0 %v862
        %998 = vmatpush1.bf16.msra.mxu0 %v861
        %999 = vmatprep.subr.bf16.mxu0 %v865
        %1000 = vmatpush1.bf16.msra.mxu0 %v864
        %1001 = vmatprep.subr.bf16.mxu0 %v868
        %1002 = vmatpush1.bf16.msra.mxu0 %v867
        %1003 = vmatprep.subr.bf16.mxu0 %v871
        %1004 = vmatpush1.bf16.msra.mxu0 %v870
        %1005 = vmatprep.subr.bf16.mxu0 %v874
        %1006 = vmatpush1.bf16.msra.mxu0 %v873
        %1007 = vmatprep.subr.bf16.mxu0 %v877
        %1008 = vmatpush1.bf16.msra.mxu0 %v876
        %1009 = vmatprep.subr.bf16.mxu0 %v880
        %1010 = vmatpush1.bf16.msra.mxu0 %v879
        %1011 = vmatprep.subr.bf16.mxu0 %v883
        %1012 = vmatpush1.bf16.msra.mxu0 %v882
        %1013 = vmatprep.mubr.bf16.mxu0 %v502
        %1014 = vmatmul.mubr.bf16.gmra.mrb[0].mxu0 %v501
        %v1015 = vpop.f32.mrb[0].mxu0
        %v1016 = vadd.f32 0.0, %v1015
        %v1017 = vpop.f32.mrb[0].mxu0
        %v1018 = vadd.f32 0.0, %v1017
        %v1019 = vpop.f32.mrb[0].mxu0
        %v1020 = vadd.f32 0.0, %v1019
        %v1021 = vpop.f32.mrb[0].mxu0
        %v1022 = vadd.f32 0.0, %v1021
        %1023 = vmatprep.mubr.bf16.mxu0 %v505
        %1024 = vmatmul.mubr.bf16.gmra.mrb[0].mxu0 %v504
        %v1025 = vpop.f32.mrb[0].mxu0
        %v1026 = vadd.f32 0.0, %v1025
        %v1027 = vpop.f32.mrb[0].mxu0
        %v1028 = vadd.f32 0.0, %v1027
        %v1029 = vpop.f32.mrb[0].mxu0
        %v1030 = vadd.f32 0.0, %v1029
        %v1031 = vpop.f32.mrb[0].mxu0
        %v1032 = vadd.f32 0.0, %v1031
        %1033 = vmatprep.mubr.bf16.mxu0 %v508
        %1034 = vmatmul.mubr.bf16.gmra.mrb[0].mxu0 %v507
        %v1035 = vpop.f32.mrb[0].mxu0
        %v1036 = vadd.f32 0.0, %v1035
        %v1037 = vpop.f32.mrb[0].mxu0
        %v1038 = vadd.f32 0.0, %v1037
        %v1039 = vpop.f32.mrb[0].mxu0
        %v1040 = vadd.f32 0.0, %v1039
        %v1041 = vpop.f32.mrb[0].mxu0
        %v1042 = vadd.f32 0.0, %v1041
        %1043 = vmatprep.mubr.bf16.mxu0 %v511
        %1044 = vmatmul.mubr.bf16.gmra.mrb[0].mxu0 %v510
        %v1045 = vpop.f32.mrb[0].mxu0
        %v1046 = vadd.f32 0.0, %v1045
        %v1047 = vpop.f32.mrb[0].mxu0
        %v1048 = vadd.f32 0.0, %v1047
        %v1049 = vpop.f32.mrb[0].mxu0
        %v1050 = vadd.f32 0.0, %v1049
        %v1051 = vpop.f32.mrb[0].mxu0
        %v1052 = vadd.f32 0.0, %v1051
        %1053 = vmatprep.mubr.bf16.mxu0 %v514
        %1054 = vmatmul.mubr.bf16.gmra.mrb[0].mxu0 %v513
        %v1055 = vpop.f32.mrb[0].mxu0
        %v1056 = vadd.f32 0.0, %v1055
        %v1057 = vpop.f32.mrb[0].mxu0
        %v1058 = vadd.f32 0.0, %v1057
        %v1059 = vpop.f32.mrb[0].mxu0
        %v1060 = vadd.f32 0.0, %v1059
        %v1061 = vpop.f32.mrb[0].mxu0
        %v1062 = vadd.f32 0.0, %v1061
        %1063 = vmatprep.mubr.bf16.mxu0 %v517
        %1064 = vmatmul.mubr.bf16.gmra.mrb[0].mxu0 %v516
        %v1065 = vpop.f32.mrb[0].mxu0
        %v1066 = vadd.f32 0.0, %v1065
        %v1067 = vpop.f32.mrb[0].mxu0
        %v1068 = vadd.f32 0.0, %v1067
        %v1069 = vpop.f32.mrb[0].mxu0
        %v1070 = vadd.f32 0.0, %v1069
        %v1071 = vpop.f32.mrb[0].mxu0
        %v1072 = vadd.f32 0.0, %v1071
        %1073 = vmatprep.mubr.bf16.mxu0 %v520
        %1074 = vmatmul.mubr.bf16.gmra.mrb[0].mxu0 %v519
        %v1075 = vpop.f32.mrb[0].mxu0
        %v1076 = vadd.f32 0.0, %v1075
        %v1077 = vpop.f32.mrb[0].mxu0
        %v1078 = vadd.f32 0.0, %v1077
        %v1079 = vpop.f32.mrb[0].mxu0
        %v1080 = vadd.f32 0.0, %v1079
        %v1081 = vpop.f32.mrb[0].mxu0
        %v1082 = vadd.f32 0.0, %v1081
        %1083 = vmatprep.mubr.bf16.mxu0 %v523
        %1084 = vmatmul.mubr.bf16.gmra.mrb[0].mxu0 %v522
        %v1085 = vpop.f32.mrb[0].mxu0
        %v1086 = vadd.f32 0.0, %v1085
        %v1087 = vpop.f32.mrb[0].mxu0
        %v1088 = vadd.f32 0.0, %v1087
        %v1089 = vpop.f32.mrb[0].mxu0
        %v1090 = vadd.f32 0.0, %v1089
        %v1091 = vpop.f32.mrb[0].mxu0
        %v1092 = vadd.f32 0.0, %v1091
        %1093 = vmatprep.mubr.bf16.mxu0 %v526
        %1094 = vmatmul.mubr.bf16.gmra.mrb[0].mxu0 %v525
        %v1095 = vpop.f32.mrb[0].mxu0
        %v1096 = vadd.f32 0.0, %v1095
        %v1097 = vpop.f32.mrb[0].mxu0
        %v1098 = vadd.f32 0.0, %v1097
        %v1099 = vpop.f32.mrb[0].mxu0
        %v1100 = vadd.f32 0.0, %v1099
        %v1101 = vpop.f32.mrb[0].mxu0
        %v1102 = vadd.f32 0.0, %v1101
        %1103 = vmatprep.mubr.bf16.mxu0 %v529
        %1104 = vmatmul.mubr.bf16.gmra.mrb[0].mxu0 %v528
        %v1105 = vpop.f32.mrb[0].mxu0
        %v1106 = vadd.f32 0.0, %v1105
        %v1107 = vpop.f32.mrb[0].mxu0
        %v1108 = vadd.f32 0.0, %v1107
        %v1109 = vpop.f32.mrb[0].mxu0
        %v1110 = vadd.f32 0.0, %v1109
        %v1111 = vpop.f32.mrb[0].mxu0
        %v1112 = vadd.f32 0.0, %v1111
        %1113 = vmatprep.mubr.bf16.mxu0 %v532
        %1114 = vmatmul.mubr.bf16.gmra.mrb[0].mxu0 %v531
        %v1115 = vpop.f32.mrb[0].mxu0
        %v1116 = vadd.f32 0.0, %v1115
        %v1117 = vpop.f32.mrb[0].mxu0
        %v1118 = vadd.f32 0.0, %v1117
        %v1119 = vpop.f32.mrb[0].mxu0
        %v1120 = vadd.f32 0.0, %v1119
        %v1121 = vpop.f32.mrb[0].mxu0
        %v1122 = vadd.f32 0.0, %v1121
        %1123 = vmatprep.mubr.bf16.mxu0 %v535
        %1124 = vmatmul.mubr.bf16.gmra.mrb[0].mxu0 %v534
        %v1125 = vpop.f32.mrb[0].mxu0
        %v1126 = vadd.f32 0.0, %v1125
        %v1127 = vpop.f32.mrb[0].mxu0
        %v1128 = vadd.f32 0.0, %v1127
        %v1129 = vpop.f32.mrb[0].mxu0
        %v1130 = vadd.f32 0.0, %v1129
        %v1131 = vpop.f32.mrb[0].mxu0
        %v1132 = vadd.f32 0.0, %v1131
        %1133 = vmatprep.mubr.bf16.mxu0 %v538
        %1134 = vmatmul.mubr.bf16.gmra.mrb[0].mxu0 %v537
        %v1135 = vpop.f32.mrb[0].mxu0
        %v1136 = vadd.f32 0.0, %v1135
        %v1137 = vpop.f32.mrb[0].mxu0
        %v1138 = vadd.f32 0.0, %v1137
        %v1139 = vpop.f32.mrb[0].mxu0
        %v1140 = vadd.f32 0.0, %v1139
        %v1141 = vpop.f32.mrb[0].mxu0
        %v1142 = vadd.f32 0.0, %v1141
        %1143 = vmatprep.mubr.bf16.mxu0 %v541
        %1144 = vmatmul.mubr.bf16.gmra.mrb[0].mxu0 %v540
        %v1145 = vpop.f32.mrb[0].mxu0
        %v1146 = vadd.f32 0.0, %v1145
        %v1147 = vpop.f32.mrb[0].mxu0
        %v1148 = vadd.f32 0.0, %v1147
        %v1149 = vpop.f32.mrb[0].mxu0
        %v1150 = vadd.f32 0.0, %v1149
        %v1151 = vpop.f32.mrb[0].mxu0
        %v1152 = vadd.f32 0.0, %v1151
        %1153 = vmatprep.mubr.bf16.mxu0 %v544
        %1154 = vmatmul.mubr.bf16.gmra.mrb[0].mxu0 %v543
        %v1155 = vpop.f32.mrb[0].mxu0
        %v1156 = vadd.f32 0.0, %v1155
        %v1157 = vpop.f32.mrb[0].mxu0
        %v1158 = vadd.f32 0.0, %v1157
        %v1159 = vpop.f32.mrb[0].mxu0
        %v1160 = vadd.f32 0.0, %v1159
        %v1161 = vpop.f32.mrb[0].mxu0
        %v1162 = vadd.f32 0.0, %v1161
        %1163 = vmatprep.mubr.bf16.mxu0 %v547
        %1164 = vmatmul.mubr.bf16.gmra.mrb[0].mxu0 %v546
        %v1165 = vpop.f32.mrb[0].mxu0
        %v1166 = vadd.f32 0.0, %v1165
        %v1167 = vpop.f32.mrb[0].mxu0
        %v1168 = vadd.f32 0.0, %v1167
        %v1169 = vpop.f32.mrb[0].mxu0
        %v1170 = vadd.f32 0.0, %v1169
        %v1171 = vpop.f32.mrb[0].mxu0
        %v1172 = vadd.f32 0.0, %v1171
        %1173 = vdwg.mxu0
        %1174 = vmatprep.subr.bf16.mxu0 %v886
        %1175 = vmatpush1.bf16.msra.mxu0 %v885
        %1176 = vmatprep.subr.bf16.mxu0 %v889
        %1177 = vmatpush1.bf16.msra.mxu0 %v888
        %1178 = vmatprep.subr.bf16.mxu0 %v892
        %1179 = vmatpush1.bf16.msra.mxu0 %v891
        %1180 = vmatprep.subr.bf16.mxu0 %v895
        %1181 = vmatpush1.bf16.msra.mxu0 %v894
        %1182 = vmatprep.subr.bf16.mxu0 %v898
        %1183 = vmatpush1.bf16.msra.mxu0 %v897
        %1184 = vmatprep.subr.bf16.mxu0 %v901
        %1185 = vmatpush1.bf16.msra.mxu0 %v900
        %1186 = vmatprep.subr.bf16.mxu0 %v904
        %1187 = vmatpush1.bf16.msra.mxu0 %v903
        %1188 = vmatprep.subr.bf16.mxu0 %v907
        %1189 = vmatpush1.bf16.msra.mxu0 %v906
        %1190 = vmatprep.subr.bf16.mxu0 0
        %1191 = vmatpush1.bf16.msra.mxu0 0
        %1192 = vmatprep.subr.bf16.mxu0 0
        %1193 = vmatpush1.bf16.msra.mxu0 0
        %1194 = vmatprep.subr.bf16.mxu0 0
        %1195 = vmatpush1.bf16.msra.mxu0 0
        %1196 = vmatprep.subr.bf16.mxu0 0
        %1197 = vmatpush1.bf16.msra.mxu0 0
        %1198 = vmatprep.subr.bf16.mxu0 0
        %1199 = vmatpush1.bf16.msra.mxu0 0
        %1200 = vmatprep.subr.bf16.mxu0 0
        %1201 = vmatpush1.bf16.msra.mxu0 0
        %1202 = vmatprep.subr.bf16.mxu0 0
        %1203 = vmatpush1.bf16.msra.mxu0 0
        %1204 = vmatprep.subr.bf16.mxu0 0
        %1205 = vmatpush1.bf16.msra.mxu0 0
        %1206 = vmatprep.mubr.bf16.mxu0 0
        %1207 = vmatmul.mubr.bf16.gmra.mrb[0].mxu0 %v503
        %v1208 = vpop.f32.mrb[0].mxu0
        %v1209 = vadd.f32 %v1016, %v1208
        %v1210 = vpop.f32.mrb[0].mxu0
        %v1211 = vadd.f32 %v1018, %v1210
        %v1212 = vpop.f32.mrb[0].mxu0
        %v1213 = vadd.f32 %v1020, %v1212
        %v1214 = vpop.f32.mrb[0].mxu0
        %v1215 = vadd.f32 %v1022, %v1214
        %1216 = vmatprep.mubr.bf16.mxu0 0
        %1217 = vmatmul.mubr.bf16.gmra.mrb[0].mxu0 %v506
        %v1218 = vpop.f32.mrb[0].mxu0
        %v1219 = vadd.f32 %v1026, %v1218
        %v1220 = vpop.f32.mrb[0].mxu0
        %v1221 = vadd.f32 %v1028, %v1220
        %v1222 = vpop.f32.mrb[0].mxu0
        %v1223 = vadd.f32 %v1030, %v1222
        %v1224 = vpop.f32.mrb[0].mxu0
        %v1225 = vadd.f32 %v1032, %v1224
        %1226 = vmatprep.mubr.bf16.mxu0 0
        %1227 = vmatmul.mubr.bf16.gmra.mrb[0].mxu0 %v509
        %v1228 = vpop.f32.mrb[0].mxu0
        %v1229 = vadd.f32 %v1036, %v1228
        %v1230 = vpop.f32.mrb[0].mxu0
        %v1231 = vadd.f32 %v1038, %v1230
        %v1232 = vpop.f32.mrb[0].mxu0
        %v1233 = vadd.f32 %v1040, %v1232
        %v1234 = vpop.f32.mrb[0].mxu0
        %v1235 = vadd.f32 %v1042, %v1234
        %1236 = vmatprep.mubr.bf16.mxu0 0
        %1237 = vmatmul.mubr.bf16.gmra.mrb[0].mxu0 %v512
        %v1238 = vpop.f32.mrb[0].mxu0
        %v1239 = vadd.f32 %v1046, %v1238
        %v1240 = vpop.f32.mrb[0].mxu0
        %v1241 = vadd.f32 %v1048, %v1240
        %v1242 = vpop.f32.mrb[0].mxu0
        %v1243 = vadd.f32 %v1050, %v1242
        %v1244 = vpop.f32.mrb[0].mxu0
        %v1245 = vadd.f32 %v1052, %v1244
        %1246 = vmatprep.mubr.bf16.mxu0 0
        %1247 = vmatmul.mubr.bf16.gmra.mrb[0].mxu0 %v515
        %v1248 = vpop.f32.mrb[0].mxu0
        %v1249 = vadd.f32 %v1056, %v1248
        %v1250 = vpop.f32.mrb[0].mxu0
        %v1251 = vadd.f32 %v1058, %v1250
        %v1252 = vpop.f32.mrb[0].mxu0
        %v1253 = vadd.f32 %v1060, %v1252
        %v1254 = vpop.f32.mrb[0].mxu0
        %v1255 = vadd.f32 %v1062, %v1254
        %1256 = vmatprep.mubr.bf16.mxu0 0
        %1257 = vmatmul.mubr.bf16.gmra.mrb[0].mxu0 %v518
        %v1258 = vpop.f32.mrb[0].mxu0
        %v1259 = vadd.f32 %v1066, %v1258
        %v1260 = vpop.f32.mrb[0].mxu0
        %v1261 = vadd.f32 %v1068, %v1260
        %v1262 = vpop.f32.mrb[0].mxu0
        %v1263 = vadd.f32 %v1070, %v1262
        %v1264 = vpop.f32.mrb[0].mxu0
        %v1265 = vadd.f32 %v1072, %v1264
        %1266 = vmatprep.mubr.bf16.mxu0 0
        %1267 = vmatmul.mubr.bf16.gmra.mrb[0].mxu0 %v521
        %v1268 = vpop.f32.mrb[0].mxu0
        %v1269 = vadd.f32 %v1076, %v1268
        %v1270 = vpop.f32.mrb[0].mxu0
        %v1271 = vadd.f32 %v1078, %v1270
        %v1272 = vpop.f32.mrb[0].mxu0
        %v1273 = vadd.f32 %v1080, %v1272
        %v1274 = vpop.f32.mrb[0].mxu0
        %v1275 = vadd.f32 %v1082, %v1274
        %1276 = vmatprep.mubr.bf16.mxu0 0
        %1277 = vmatmul.mubr.bf16.gmra.mrb[0].mxu0 %v524
        %v1278 = vpop.f32.mrb[0].mxu0
        %v1279 = vadd.f32 %v1086, %v1278
        %v1280 = vpop.f32.mrb[0].mxu0
        %v1281 = vadd.f32 %v1088, %v1280
        %v1282 = vpop.f32.mrb[0].mxu0
        %v1283 = vadd.f32 %v1090, %v1282
        %v1284 = vpop.f32.mrb[0].mxu0
        %v1285 = vadd.f32 %v1092, %v1284
        %1286 = vmatprep.mubr.bf16.mxu0 0
        %1287 = vmatmul.mubr.bf16.gmra.mrb[0].mxu0 %v527
        %v1288 = vpop.f32.mrb[0].mxu0
        %v1289 = vadd.f32 %v1096, %v1288
        %v1290 = vpop.f32.mrb[0].mxu0
        %v1291 = vadd.f32 %v1098, %v1290
        %v1292 = vpop.f32.mrb[0].mxu0
        %v1293 = vadd.f32 %v1100, %v1292
        %v1294 = vpop.f32.mrb[0].mxu0
        %v1295 = vadd.f32 %v1102, %v1294
        %1296 = vmatprep.mubr.bf16.mxu0 0
        %1297 = vmatmul.mubr.bf16.gmra.mrb[0].mxu0 %v530
        %v1298 = vpop.f32.mrb[0].mxu0
        %v1299 = vadd.f32 %v1106, %v1298
        %v1300 = vpop.f32.mrb[0].mxu0
        %v1301 = vadd.f32 %v1108, %v1300
        %v1302 = vpop.f32.mrb[0].mxu0
        %v1303 = vadd.f32 %v1110, %v1302
        %v1304 = vpop.f32.mrb[0].mxu0
        %v1305 = vadd.f32 %v1112, %v1304
        %1306 = vmatprep.mubr.bf16.mxu0 0
        %1307 = vmatmul.mubr.bf16.gmra.mrb[0].mxu0 %v533
        %v1308 = vpop.f32.mrb[0].mxu0
        %v1309 = vadd.f32 %v1116, %v1308
        %v1310 = vpop.f32.mrb[0].mxu0
        %v1311 = vadd.f32 %v1118, %v1310
        %v1312 = vpop.f32.mrb[0].mxu0
        %v1313 = vadd.f32 %v1120, %v1312
        %v1314 = vpop.f32.mrb[0].mxu0
        %v1315 = vadd.f32 %v1122, %v1314
        %1316 = vmatprep.mubr.bf16.mxu0 0
        %1317 = vmatmul.mubr.bf16.gmra.mrb[0].mxu0 %v536
        %v1318 = vpop.f32.mrb[0].mxu0
        %v1319 = vadd.f32 %v1126, %v1318
        %v1320 = vpop.f32.mrb[0].mxu0
        %v1321 = vadd.f32 %v1128, %v1320
        %v1322 = vpop.f32.mrb[0].mxu0
        %v1323 = vadd.f32 %v1130, %v1322
        %v1324 = vpop.f32.mrb[0].mxu0
        %v1325 = vadd.f32 %v1132, %v1324
        %1326 = vmatprep.mubr.bf16.mxu0 0
        %1327 = vmatmul.mubr.bf16.gmra.mrb[0].mxu0 %v539
        %v1328 = vpop.f32.mrb[0].mxu0
        %v1329 = vadd.f32 %v1136, %v1328
        %v1330 = vpop.f32.mrb[0].mxu0
        %v1331 = vadd.f32 %v1138, %v1330
        %v1332 = vpop.f32.mrb[0].mxu0
        %v1333 = vadd.f32 %v1140, %v1332
        %v1334 = vpop.f32.mrb[0].mxu0
        %v1335 = vadd.f32 %v1142, %v1334
        %1336 = vmatprep.mubr.bf16.mxu0 0
        %1337 = vmatmul.mubr.bf16.gmra.mrb[0].mxu0 %v542
        %v1338 = vpop.f32.mrb[0].mxu0
        %v1339 = vadd.f32 %v1146, %v1338
        %v1340 = vpop.f32.mrb[0].mxu0
        %v1341 = vadd.f32 %v1148, %v1340
        %v1342 = vpop.f32.mrb[0].mxu0
        %v1343 = vadd.f32 %v1150, %v1342
        %v1344 = vpop.f32.mrb[0].mxu0
        %v1345 = vadd.f32 %v1152, %v1344
        %1346 = vmatprep.mubr.bf16.mxu0 0
        %1347 = vmatmul.mubr.bf16.gmra.mrb[0].mxu0 %v545
        %v1348 = vpop.f32.mrb[0].mxu0
        %v1349 = vadd.f32 %v1156, %v1348
        %v1350 = vpop.f32.mrb[0].mxu0
        %v1351 = vadd.f32 %v1158, %v1350
        %v1352 = vpop.f32.mrb[0].mxu0
        %v1353 = vadd.f32 %v1160, %v1352
        %v1354 = vpop.f32.mrb[0].mxu0
        %v1355 = vadd.f32 %v1162, %v1354
        %1356 = vmatprep.mubr.bf16.mxu0 0
        %1357 = vmatmul.mubr.bf16.gmra.mrb[0].mxu0 %v548
        %v1358 = vpop.f32.mrb[0].mxu0
        %v1359 = vadd.f32 %v1166, %v1358
        %v1360 = vpop.f32.mrb[0].mxu0
        %v1361 = vadd.f32 %v1168, %v1360
        %v1362 = vpop.f32.mrb[0].mxu0
        %v1363 = vadd.f32 %v1170, %v1362
        %v1364 = vpop.f32.mrb[0].mxu0
        %v1365 = vadd.f32 %v1172, %v1364
        %1366 = vdwg.mxu0
        %1367 = vmatprep.subr.bf16.mxu0 0
        %1368 = vmatpush1.bf16.msra.mxu0 %v839
        %1369 = vmatprep.subr.bf16.mxu0 0
        %1370 = vmatpush1.bf16.msra.mxu0 %v842
        %1371 = vmatprep.subr.bf16.mxu0 0
        %1372 = vmatpush1.bf16.msra.mxu0 %v845
        %1373 = vmatprep.subr.bf16.mxu0 0
        %1374 = vmatpush1.bf16.msra.mxu0 %v848
        %1375 = vmatprep.subr.bf16.mxu0 0
        %1376 = vmatpush1.bf16.msra.mxu0 %v851
        %1377 = vmatprep.subr.bf16.mxu0 0
        %1378 = vmatpush1.bf16.msra.mxu0 %v854
        %1379 = vmatprep.subr.bf16.mxu0 0
        %1380 = vmatpush1.bf16.msra.mxu0 %v857
        %1381 = vmatprep.subr.bf16.mxu0 0
        %1382 = vmatpush1.bf16.msra.mxu0 %v860
        %1383 = vmatprep.subr.bf16.mxu0 0
        %1384 = vmatpush1.bf16.msra.mxu0 %v863
        %1385 = vmatprep.subr.bf16.mxu0 0
        %1386 = vmatpush1.bf16.msra.mxu0 %v866
        %1387 = vmatprep.subr.bf16.mxu0 0
        %1388 = vmatpush1.bf16.msra.mxu0 %v869
        %1389 = vmatprep.subr.bf16.mxu0 0
        %1390 = vmatpush1.bf16.msra.mxu0 %v872
        %1391 = vmatprep.subr.bf16.mxu0 0
        %1392 = vmatpush1.bf16.msra.mxu0 %v875
        %1393 = vmatprep.subr.bf16.mxu0 0
        %1394 = vmatpush1.bf16.msra.mxu0 %v878
        %1395 = vmatprep.subr.bf16.mxu0 0
        %1396 = vmatpush1.bf16.msra.mxu0 %v881
        %1397 = vmatprep.subr.bf16.mxu0 0
        %1398 = vmatpush1.bf16.msra.mxu0 %v884
        %1399 = vmatprep.mubr.bf16.mxu0 %v502
        %1400 = vmatmul.mubr.bf16.gmra.mrb[0].mxu0 %v501
        %v1401 = vpop.f32.mrb[0].mxu0
        %v1402 = vadd.f32 0.0, %v1401
        %v1403 = vpop.f32.mrb[0].mxu0
        %v1404 = vpop.f32.mrb[0].mxu0
        %v1405 = vadd.f32 0.0, %v1404
        %v1406 = vpop.f32.mrb[0].mxu0
        %1407 = vmatprep.mubr.bf16.mxu0 %v505
        %1408 = vmatmul.mubr.bf16.gmra.mrb[0].mxu0 %v504
        %v1409 = vpop.f32.mrb[0].mxu0
        %v1410 = vadd.f32 0.0, %v1409
        %v1411 = vpop.f32.mrb[0].mxu0
        %v1412 = vpop.f32.mrb[0].mxu0
        %v1413 = vadd.f32 0.0, %v1412
        %v1414 = vpop.f32.mrb[0].mxu0
        %1415 = vmatprep.mubr.bf16.mxu0 %v508
        %1416 = vmatmul.mubr.bf16.gmra.mrb[0].mxu0 %v507
        %v1417 = vpop.f32.mrb[0].mxu0
        %v1418 = vadd.f32 0.0, %v1417
        %v1419 = vpop.f32.mrb[0].mxu0
        %v1420 = vpop.f32.mrb[0].mxu0
        %v1421 = vadd.f32 0.0, %v1420
        %v1422 = vpop.f32.mrb[0].mxu0
        %1423 = vmatprep.mubr.bf16.mxu0 %v511
        %1424 = vmatmul.mubr.bf16.gmra.mrb[0].mxu0 %v510
        %v1425 = vpop.f32.mrb[0].mxu0
        %v1426 = vadd.f32 0.0, %v1425
        %v1427 = vpop.f32.mrb[0].mxu0
        %v1428 = vpop.f32.mrb[0].mxu0
        %v1429 = vadd.f32 0.0, %v1428
        %v1430 = vpop.f32.mrb[0].mxu0
        %1431 = vmatprep.mubr.bf16.mxu0 %v514
        %1432 = vmatmul.mubr.bf16.gmra.mrb[0].mxu0 %v513
        %v1433 = vpop.f32.mrb[0].mxu0
        %v1434 = vadd.f32 0.0, %v1433
        %v1435 = vpop.f32.mrb[0].mxu0
        %v1436 = vpop.f32.mrb[0].mxu0
        %v1437 = vadd.f32 0.0, %v1436
        %v1438 = vpop.f32.mrb[0].mxu0
        %1439 = vmatprep.mubr.bf16.mxu0 %v517
        %1440 = vmatmul.mubr.bf16.gmra.mrb[0].mxu0 %v516
        %v1441 = vpop.f32.mrb[0].mxu0
        %v1442 = vadd.f32 0.0, %v1441
        %v1443 = vpop.f32.mrb[0].mxu0
        %v1444 = vpop.f32.mrb[0].mxu0
        %v1445 = vadd.f32 0.0, %v1444
        %v1446 = vpop.f32.mrb[0].mxu0
        %1447 = vmatprep.mubr.bf16.mxu0 %v520
        %1448 = vmatmul.mubr.bf16.gmra.mrb[0].mxu0 %v519
        %v1449 = vpop.f32.mrb[0].mxu0
        %v1450 = vadd.f32 0.0, %v1449
        %v1451 = vpop.f32.mrb[0].mxu0
        %v1452 = vpop.f32.mrb[0].mxu0
        %v1453 = vadd.f32 0.0, %v1452
        %v1454 = vpop.f32.mrb[0].mxu0
        %1455 = vmatprep.mubr.bf16.mxu0 %v523
        %1456 = vmatmul.mubr.bf16.gmra.mrb[0].mxu0 %v522
        %v1457 = vpop.f32.mrb[0].mxu0
        %v1458 = vadd.f32 0.0, %v1457
        %v1459 = vpop.f32.mrb[0].mxu0
        %v1460 = vpop.f32.mrb[0].mxu0
        %v1461 = vadd.f32 0.0, %v1460
        %v1462 = vpop.f32.mrb[0].mxu0
        %1463 = vmatprep.mubr.bf16.mxu0 %v526
        %1464 = vmatmul.mubr.bf16.gmra.mrb[0].mxu0 %v525
        %v1465 = vpop.f32.mrb[0].mxu0
        %v1466 = vadd.f32 0.0, %v1465
        %v1467 = vpop.f32.mrb[0].mxu0
        %v1468 = vpop.f32.mrb[0].mxu0
        %v1469 = vadd.f32 0.0, %v1468
        %v1470 = vpop.f32.mrb[0].mxu0
        %1471 = vmatprep.mubr.bf16.mxu0 %v529
        %1472 = vmatmul.mubr.bf16.gmra.mrb[0].mxu0 %v528
        %v1473 = vpop.f32.mrb[0].mxu0
        %v1474 = vadd.f32 0.0, %v1473
        %v1475 = vpop.f32.mrb[0].mxu0
        %v1476 = vpop.f32.mrb[0].mxu0
        %v1477 = vadd.f32 0.0, %v1476
        %v1478 = vpop.f32.mrb[0].mxu0
        %1479 = vmatprep.mubr.bf16.mxu0 %v532
        %1480 = vmatmul.mubr.bf16.gmra.mrb[0].mxu0 %v531
        %v1481 = vpop.f32.mrb[0].mxu0
        %v1482 = vadd.f32 0.0, %v1481
        %v1483 = vpop.f32.mrb[0].mxu0
        %v1484 = vpop.f32.mrb[0].mxu0
        %v1485 = vadd.f32 0.0, %v1484
        %v1486 = vpop.f32.mrb[0].mxu0
        %1487 = vmatprep.mubr.bf16.mxu0 %v535
        %1488 = vmatmul.mubr.bf16.gmra.mrb[0].mxu0 %v534
        %v1489 = vpop.f32.mrb[0].mxu0
        %v1490 = vadd.f32 0.0, %v1489
        %v1491 = vpop.f32.mrb[0].mxu0
        %v1492 = vpop.f32.mrb[0].mxu0
        %v1493 = vadd.f32 0.0, %v1492
        %v1494 = vpop.f32.mrb[0].mxu0
        %1495 = vmatprep.mubr.bf16.mxu0 %v538
        %1496 = vmatmul.mubr.bf16.gmra.mrb[0].mxu0 %v537
        %v1497 = vpop.f32.mrb[0].mxu0
        %v1498 = vadd.f32 0.0, %v1497
        %v1499 = vpop.f32.mrb[0].mxu0
        %v1500 = vpop.f32.mrb[0].mxu0
        %v1501 = vadd.f32 0.0, %v1500
        %v1502 = vpop.f32.mrb[0].mxu0
        %1503 = vmatprep.mubr.bf16.mxu0 %v541
        %1504 = vmatmul.mubr.bf16.gmra.mrb[0].mxu0 %v540
        %v1505 = vpop.f32.mrb[0].mxu0
        %v1506 = vadd.f32 0.0, %v1505
        %v1507 = vpop.f32.mrb[0].mxu0
        %v1508 = vpop.f32.mrb[0].mxu0
        %v1509 = vadd.f32 0.0, %v1508
        %v1510 = vpop.f32.mrb[0].mxu0
        %1511 = vmatprep.mubr.bf16.mxu0 %v544
        %1512 = vmatmul.mubr.bf16.gmra.mrb[0].mxu0 %v543
        %v1513 = vpop.f32.mrb[0].mxu0
        %v1514 = vadd.f32 0.0, %v1513
        %v1515 = vpop.f32.mrb[0].mxu0
        %v1516 = vpop.f32.mrb[0].mxu0
        %v1517 = vadd.f32 0.0, %v1516
        %v1518 = vpop.f32.mrb[0].mxu0
        %1519 = vmatprep.mubr.bf16.mxu0 %v547
        %1520 = vmatmul.mubr.bf16.gmra.mrb[0].mxu0 %v546
        %v1521 = vpop.f32.mrb[0].mxu0
        %v1522 = vadd.f32 0.0, %v1521
        %v1523 = vpop.f32.mrb[0].mxu0
        %v1524 = vpop.f32.mrb[0].mxu0
        %v1525 = vadd.f32 0.0, %v1524
        %v1526 = vpop.f32.mrb[0].mxu0
        %1527 = vdwg.mxu0
        %1528 = vmatprep.subr.bf16.mxu0 0
        %1529 = vmatpush1.bf16.msra.mxu0 %v887
        %1530 = vmatprep.subr.bf16.mxu0 0
        %1531 = vmatpush1.bf16.msra.mxu0 %v890
        %1532 = vmatprep.subr.bf16.mxu0 0
        %1533 = vmatpush1.bf16.msra.mxu0 %v893
        %1534 = vmatprep.subr.bf16.mxu0 0
        %1535 = vmatpush1.bf16.msra.mxu0 %v896
        %1536 = vmatprep.subr.bf16.mxu0 0
        %1537 = vmatpush1.bf16.msra.mxu0 %v899
        %1538 = vmatprep.subr.bf16.mxu0 0
        %1539 = vmatpush1.bf16.msra.mxu0 %v902
        %1540 = vmatprep.subr.bf16.mxu0 0
        %1541 = vmatpush1.bf16.msra.mxu0 %v905
        %1542 = vmatprep.subr.bf16.mxu0 0
        %1543 = vmatpush1.bf16.msra.mxu0 %v908
        %1544 = vmatprep.subr.bf16.mxu0 0
        %1545 = vmatpush1.bf16.msra.mxu0 0
        %1546 = vmatprep.subr.bf16.mxu0 0
        %1547 = vmatpush1.bf16.msra.mxu0 0
        %1548 = vmatprep.subr.bf16.mxu0 0
        %1549 = vmatpush1.bf16.msra.mxu0 0
        %1550 = vmatprep.subr.bf16.mxu0 0
        %1551 = vmatpush1.bf16.msra.mxu0 0
        %1552 = vmatprep.subr.bf16.mxu0 0
        %1553 = vmatpush1.bf16.msra.mxu0 0
        %1554 = vmatprep.subr.bf16.mxu0 0
        %1555 = vmatpush1.bf16.msra.mxu0 0
        %1556 = vmatprep.subr.bf16.mxu0 0
        %1557 = vmatpush1.bf16.msra.mxu0 0
        %1558 = vmatprep.subr.bf16.mxu0 0
        %1559 = vmatpush1.bf16.msra.mxu0 0
        %1560 = vmatprep.mubr.bf16.mxu0 0
        %1561 = vmatmul.mubr.bf16.gmra.mrb[0].mxu0 %v503
        %v1562 = vpop.f32.mrb[0].mxu0
        %v1563 = vadd.f32 %v1402, %v1562
        %v1564 = vpop.f32.mrb[0].mxu0
        %v1565 = vpop.f32.mrb[0].mxu0
        %v1566 = vadd.f32 %v1405, %v1565
        %v1567 = vpop.f32.mrb[0].mxu0
        %1568 = vmatprep.mubr.bf16.mxu0 0
        %1569 = vmatmul.mubr.bf16.gmra.mrb[0].mxu0 %v506
        %v1570 = vpop.f32.mrb[0].mxu0
        %v1571 = vadd.f32 %v1410, %v1570
        %v1572 = vpop.f32.mrb[0].mxu0
        %v1573 = vpop.f32.mrb[0].mxu0
        %v1574 = vadd.f32 %v1413, %v1573
        %v1575 = vpop.f32.mrb[0].mxu0
        %1576 = vmatprep.mubr.bf16.mxu0 0
        %1577 = vmatmul.mubr.bf16.gmra.mrb[0].mxu0 %v509
        %v1578 = vpop.f32.mrb[0].mxu0
        %v1579 = vadd.f32 %v1418, %v1578
        %v1580 = vpop.f32.mrb[0].mxu0
        %v1581 = vpop.f32.mrb[0].mxu0
        %v1582 = vadd.f32 %v1421, %v1581
        %v1583 = vpop.f32.mrb[0].mxu0
        %1584 = vmatprep.mubr.bf16.mxu0 0
        %1585 = vmatmul.mubr.bf16.gmra.mrb[0].mxu0 %v512
        %v1586 = vpop.f32.mrb[0].mxu0
        %v1587 = vadd.f32 %v1426, %v1586
        %v1588 = vpop.f32.mrb[0].mxu0
        %v1589 = vpop.f32.mrb[0].mxu0
        %v1590 = vadd.f32 %v1429, %v1589
        %v1591 = vpop.f32.mrb[0].mxu0
        %1592 = vmatprep.mubr.bf16.mxu0 0
        %1593 = vmatmul.mubr.bf16.gmra.mrb[0].mxu0 %v515
        %v1594 = vpop.f32.mrb[0].mxu0
        %v1595 = vadd.f32 %v1434, %v1594
        %v1596 = vpop.f32.mrb[0].mxu0
        %v1597 = vpop.f32.mrb[0].mxu0
        %v1598 = vadd.f32 %v1437, %v1597
        %v1599 = vpop.f32.mrb[0].mxu0
        %1600 = vmatprep.mubr.bf16.mxu0 0
        %1601 = vmatmul.mubr.bf16.gmra.mrb[0].mxu0 %v518
        %v1602 = vpop.f32.mrb[0].mxu0
        %v1603 = vadd.f32 %v1442, %v1602
        %v1604 = vpop.f32.mrb[0].mxu0
        %v1605 = vpop.f32.mrb[0].mxu0
        %v1606 = vadd.f32 %v1445, %v1605
        %v1607 = vpop.f32.mrb[0].mxu0
        %1608 = vmatprep.mubr.bf16.mxu0 0
        %1609 = vmatmul.mubr.bf16.gmra.mrb[0].mxu0 %v521
        %v1610 = vpop.f32.mrb[0].mxu0
        %v1611 = vadd.f32 %v1450, %v1610
        %v1612 = vpop.f32.mrb[0].mxu0
        %v1613 = vpop.f32.mrb[0].mxu0
        %v1614 = vadd.f32 %v1453, %v1613
        %v1615 = vpop.f32.mrb[0].mxu0
        %1616 = vmatprep.mubr.bf16.mxu0 0
        %1617 = vmatmul.mubr.bf16.gmra.mrb[0].mxu0 %v524
        %v1618 = vpop.f32.mrb[0].mxu0
        %v1619 = vadd.f32 %v1458, %v1618
        %v1620 = vpop.f32.mrb[0].mxu0
        %v1621 = vpop.f32.mrb[0].mxu0
        %v1622 = vadd.f32 %v1461, %v1621
        %v1623 = vpop.f32.mrb[0].mxu0
        %1624 = vmatprep.mubr.bf16.mxu0 0
        %1625 = vmatmul.mubr.bf16.gmra.mrb[0].mxu0 %v527
        %v1626 = vpop.f32.mrb[0].mxu0
        %v1627 = vadd.f32 %v1466, %v1626
        %v1628 = vpop.f32.mrb[0].mxu0
        %v1629 = vpop.f32.mrb[0].mxu0
        %v1630 = vadd.f32 %v1469, %v1629
        %v1631 = vpop.f32.mrb[0].mxu0
        %1632 = vmatprep.mubr.bf16.mxu0 0
        %1633 = vmatmul.mubr.bf16.gmra.mrb[0].mxu0 %v530
        %v1634 = vpop.f32.mrb[0].mxu0
        %v1635 = vadd.f32 %v1474, %v1634
        %v1636 = vpop.f32.mrb[0].mxu0
        %v1637 = vpop.f32.mrb[0].mxu0
        %v1638 = vadd.f32 %v1477, %v1637
        %v1639 = vpop.f32.mrb[0].mxu0
        %1640 = vmatprep.mubr.bf16.mxu0 0
        %1641 = vmatmul.mubr.bf16.gmra.mrb[0].mxu0 %v533
        %v1642 = vpop.f32.mrb[0].mxu0
        %v1643 = vadd.f32 %v1482, %v1642
        %v1644 = vpop.f32.mrb[0].mxu0
        %v1645 = vpop.f32.mrb[0].mxu0
        %v1646 = vadd.f32 %v1485, %v1645
        %v1647 = vpop.f32.mrb[0].mxu0
        %1648 = vmatprep.mubr.bf16.mxu0 0
        %1649 = vmatmul.mubr.bf16.gmra.mrb[0].mxu0 %v536
        %v1650 = vpop.f32.mrb[0].mxu0
        %v1651 = vadd.f32 %v1490, %v1650
        %v1652 = vpop.f32.mrb[0].mxu0
        %v1653 = vpop.f32.mrb[0].mxu0
        %v1654 = vadd.f32 %v1493, %v1653
        %v1655 = vpop.f32.mrb[0].mxu0
        %1656 = vmatprep.mubr.bf16.mxu0 0
        %1657 = vmatmul.mubr.bf16.gmra.mrb[0].mxu0 %v539
        %v1658 = vpop.f32.mrb[0].mxu0
        %v1659 = vadd.f32 %v1498, %v1658
        %v1660 = vpop.f32.mrb[0].mxu0
        %v1661 = vpop.f32.mrb[0].mxu0
        %v1662 = vadd.f32 %v1501, %v1661
        %v1663 = vpop.f32.mrb[0].mxu0
        %1664 = vmatprep.mubr.bf16.mxu0 0
        %1665 = vmatmul.mubr.bf16.gmra.mrb[0].mxu0 %v542
        %v1666 = vpop.f32.mrb[0].mxu0
        %v1667 = vadd.f32 %v1506, %v1666
        %v1668 = vpop.f32.mrb[0].mxu0
        %v1669 = vpop.f32.mrb[0].mxu0
        %v1670 = vadd.f32 %v1509, %v1669
        %v1671 = vpop.f32.mrb[0].mxu0
        %1672 = vmatprep.mubr.bf16.mxu0 0
        %1673 = vmatmul.mubr.bf16.gmra.mrb[0].mxu0 %v545
        %v1674 = vpop.f32.mrb[0].mxu0
        %v1675 = vadd.f32 %v1514, %v1674
        %v1676 = vpop.f32.mrb[0].mxu0
        %v1677 = vpop.f32.mrb[0].mxu0
        %v1678 = vadd.f32 %v1517, %v1677
        %v1679 = vpop.f32.mrb[0].mxu0
        %1680 = vmatprep.mubr.bf16.mxu0 0
        %1681 = vmatmul.mubr.bf16.gmra.mrb[0].mxu0 %v548
        %v1682 = vpop.f32.mrb[0].mxu0
        %v1683 = vadd.f32 %v1522, %v1682
        %v1684 = vpop.f32.mrb[0].mxu0
        %v1685 = vpop.f32.mrb[0].mxu0
        %v1686 = vadd.f32 %v1525, %v1685
        %v1687 = vpop.f32.mrb[0].mxu0
        %1688 = vdwg.mxu0
        %v1689 = vpack.c.bf16 %v1213, %v1209
        %v1690 = vpack.c.bf16 %v1223, %v1219
        %v1691 = vpack.c.bf16 %v1233, %v1229
        %v1692 = vpack.c.bf16 %v1243, %v1239
        %v1693 = vpack.c.bf16 %v1253, %v1249
        %v1694 = vpack.c.bf16 %v1263, %v1259
        %v1695 = vpack.c.bf16 %v1273, %v1269
        %v1696 = vpack.c.bf16 %v1283, %v1279
        %v1697 = vpack.c.bf16 %v1293, %v1289
        %v1698 = vpack.c.bf16 %v1303, %v1299
        %v1699 = vpack.c.bf16 %v1313, %v1309
        %v1700 = vpack.c.bf16 %v1323, %v1319
        %v1701 = vpack.c.bf16 %v1333, %v1329
        %v1702 = vpack.c.bf16 %v1343, %v1339
        %v1703 = vpack.c.bf16 %v1353, %v1349
        %v1704 = vpack.c.bf16 %v1363, %v1359
        %v1705 = vpack.c.bf16 %v1215, %v1211
        %v1706 = vpack.c.bf16 %v1225, %v1221
        %v1707 = vpack.c.bf16 %v1235, %v1231
        %v1708 = vpack.c.bf16 %v1245, %v1241
        %v1709 = vpack.c.bf16 %v1255, %v1251
        %v1710 = vpack.c.bf16 %v1265, %v1261
        %v1711 = vpack.c.bf16 %v1275, %v1271
        %v1712 = vpack.c.bf16 %v1285, %v1281
        %v1713 = vpack.c.bf16 %v1295, %v1291
        %v1714 = vpack.c.bf16 %v1305, %v1301
        %v1715 = vpack.c.bf16 %v1315, %v1311
        %v1716 = vpack.c.bf16 %v1325, %v1321
        %v1717 = vpack.c.bf16 %v1335, %v1331
        %v1718 = vpack.c.bf16 %v1345, %v1341
        %v1719 = vpack.c.bf16 %v1355, %v1351
        %v1720 = vpack.c.bf16 %v1365, %v1361
        %v1721 = vpack.c.bf16 %v1566, %v1563
        %v1722 = vpack.c.bf16 %v1574, %v1571
        %v1723 = vpack.c.bf16 %v1582, %v1579
        %v1724 = vpack.c.bf16 %v1590, %v1587
        %v1725 = vpack.c.bf16 %v1598, %v1595
        %v1726 = vpack.c.bf16 %v1606, %v1603
        %v1727 = vpack.c.bf16 %v1614, %v1611
        %v1728 = vpack.c.bf16 %v1622, %v1619
        %v1729 = vpack.c.bf16 %v1630, %v1627
        %v1730 = vpack.c.bf16 %v1638, %v1635
        %v1731 = vpack.c.bf16 %v1646, %v1643
        %v1732 = vpack.c.bf16 %v1654, %v1651
        %v1733 = vpack.c.bf16 %v1662, %v1659
        %v1734 = vpack.c.bf16 %v1670, %v1667
        %v1735 = vpack.c.bf16 %v1678, %v1675
        %v1736 = vpack.c.bf16 %v1686, %v1683
        %1737 = vmatprep.subr.bf16.mxu0 0
        %1738 = vmatpush1.bf16.xpose.msra.mxu0 %v1705
        %1739 = vmatprep.subr.bf16.mxu0 0
        %1740 = vmatpush1.bf16.xpose.msra.mxu0 %v1706
        %1741 = vmatprep.subr.bf16.mxu0 0
        %1742 = vmatpush1.bf16.xpose.msra.mxu0 %v1707
        %1743 = vmatprep.subr.bf16.mxu0 0
        %1744 = vmatpush1.bf16.xpose.msra.mxu0 %v1708
        %1745 = vmatprep.subr.bf16.mxu0 0
        %1746 = vmatpush1.bf16.xpose.msra.mxu0 0
        %1747 = vmatprep.subr.bf16.mxu0 0
        %1748 = vmatpush1.bf16.xpose.msra.mxu0 0
        %1749 = vmatprep.subr.bf16.mxu0 0
        %1750 = vmatpush1.bf16.xpose.msra.mxu0 0
        %1751 = vmatprep.subr.bf16.mxu0 0
        %1752 = vmatpush1.bf16.xpose.msra.mxu0 0
        %1753 = vmatprep.subr.bf16.mxu0 0
        %1754 = vmatpush1.bf16.xpose.msra.mxu0 0
        %1755 = vmatprep.subr.bf16.mxu0 0
        %1756 = vmatpush1.bf16.xpose.msra.mxu0 0
        %1757 = vmatprep.subr.bf16.mxu0 0
        %1758 = vmatpush1.bf16.xpose.msra.mxu0 0
        %1759 = vmatprep.subr.bf16.mxu0 0
        %1760 = vmatpush1.bf16.xpose.msra.mxu0 0
        %1761 = vmatprep.subr.bf16.mxu0 0
        %1762 = vmatpush1.bf16.xpose.msra.mxu0 0
        %1763 = vmatprep.subr.bf16.mxu0 0
        %1764 = vmatpush1.bf16.xpose.msra.mxu0 0
        %1765 = vmatprep.subr.bf16.mxu0 0
        %1766 = vmatpush1.bf16.xpose.msra.mxu0 0
        %1767 = vmatprep.subr.bf16.mxu0 0
        %1768 = vmatpush1.bf16.xpose.msra.mxu0 0
        %1769 = vmatprep.mubr.bf16.mxu0 0
        %1770 = vmatmul.mubr.bf16.gmra.mrb[0].mxu0 %v1689
        %v1771 = vpop.f32.mrb[0].mxu0
        %v1772 = vadd.f32 0.0, %v1771
        %v1773 = vpop.f32.mrb[0].mxu0
        %v1774 = vpop.f32.mrb[0].mxu0
        %v1775 = vadd.f32 0.0, %v1774
        %v1776 = vpop.f32.mrb[0].mxu0
        %1777 = vmatprep.mubr.bf16.mxu0 0
        %1778 = vmatmul.mubr.bf16.gmra.mrb[0].mxu0 %v1690
        %v1779 = vpop.f32.mrb[0].mxu0
        %v1780 = vadd.f32 0.0, %v1779
        %v1781 = vpop.f32.mrb[0].mxu0
        %v1782 = vpop.f32.mrb[0].mxu0
        %v1783 = vadd.f32 0.0, %v1782
        %v1784 = vpop.f32.mrb[0].mxu0
        %1785 = vmatprep.mubr.bf16.mxu0 0
        %1786 = vmatmul.mubr.bf16.gmra.mrb[0].mxu0 %v1691
        %v1787 = vpop.f32.mrb[0].mxu0
        %v1788 = vadd.f32 0.0, %v1787
        %v1789 = vpop.f32.mrb[0].mxu0
        %v1790 = vpop.f32.mrb[0].mxu0
        %v1791 = vadd.f32 0.0, %v1790
        %v1792 = vpop.f32.mrb[0].mxu0
        %1793 = vmatprep.mubr.bf16.mxu0 0
        %1794 = vmatmul.mubr.bf16.gmra.mrb[0].mxu0 %v1692
        %v1795 = vpop.f32.mrb[0].mxu0
        %v1796 = vadd.f32 0.0, %v1795
        %v1797 = vpop.f32.mrb[0].mxu0
        %v1798 = vpop.f32.mrb[0].mxu0
        %v1799 = vadd.f32 0.0, %v1798
        %v1800 = vpop.f32.mrb[0].mxu0
        %1801 = vdwg.mxu0
        %1802 = vmatprep.subr.bf16.mxu0 0
        %1803 = vmatpush1.bf16.xpose.msra.mxu0 %v1709
        %1804 = vmatprep.subr.bf16.mxu0 0
        %1805 = vmatpush1.bf16.xpose.msra.mxu0 %v1710
        %1806 = vmatprep.subr.bf16.mxu0 0
        %1807 = vmatpush1.bf16.xpose.msra.mxu0 %v1711
        %1808 = vmatprep.subr.bf16.mxu0 0
        %1809 = vmatpush1.bf16.xpose.msra.mxu0 %v1712
        %1810 = vmatprep.subr.bf16.mxu0 0
        %1811 = vmatpush1.bf16.xpose.msra.mxu0 0
        %1812 = vmatprep.subr.bf16.mxu0 0
        %1813 = vmatpush1.bf16.xpose.msra.mxu0 0
        %1814 = vmatprep.subr.bf16.mxu0 0
        %1815 = vmatpush1.bf16.xpose.msra.mxu0 0
        %1816 = vmatprep.subr.bf16.mxu0 0
        %1817 = vmatpush1.bf16.xpose.msra.mxu0 0
        %1818 = vmatprep.subr.bf16.mxu0 0
        %1819 = vmatpush1.bf16.xpose.msra.mxu0 0
        %1820 = vmatprep.subr.bf16.mxu0 0
        %1821 = vmatpush1.bf16.xpose.msra.mxu0 0
        %1822 = vmatprep.subr.bf16.mxu0 0
        %1823 = vmatpush1.bf16.xpose.msra.mxu0 0
        %1824 = vmatprep.subr.bf16.mxu0 0
        %1825 = vmatpush1.bf16.xpose.msra.mxu0 0
        %1826 = vmatprep.subr.bf16.mxu0 0
        %1827 = vmatpush1.bf16.xpose.msra.mxu0 0
        %1828 = vmatprep.subr.bf16.mxu0 0
        %1829 = vmatpush1.bf16.xpose.msra.mxu0 0
        %1830 = vmatprep.subr.bf16.mxu0 0
        %1831 = vmatpush1.bf16.xpose.msra.mxu0 0
        %1832 = vmatprep.subr.bf16.mxu0 0
        %1833 = vmatpush1.bf16.xpose.msra.mxu0 0
        %1834 = vmatprep.mubr.bf16.mxu0 0
        %1835 = vmatmul.mubr.bf16.gmra.mrb[0].mxu0 %v1693
        %v1836 = vpop.f32.mrb[0].mxu0
        %v1837 = vadd.f32 0.0, %v1836
        %v1838 = vpop.f32.mrb[0].mxu0
        %v1839 = vpop.f32.mrb[0].mxu0
        %v1840 = vadd.f32 0.0, %v1839
        %v1841 = vpop.f32.mrb[0].mxu0
        %1842 = vmatprep.mubr.bf16.mxu0 0
        %1843 = vmatmul.mubr.bf16.gmra.mrb[0].mxu0 %v1694
        %v1844 = vpop.f32.mrb[0].mxu0
        %v1845 = vadd.f32 0.0, %v1844
        %v1846 = vpop.f32.mrb[0].mxu0
        %v1847 = vpop.f32.mrb[0].mxu0
        %v1848 = vadd.f32 0.0, %v1847
        %v1849 = vpop.f32.mrb[0].mxu0
        %1850 = vmatprep.mubr.bf16.mxu0 0
        %1851 = vmatmul.mubr.bf16.gmra.mrb[0].mxu0 %v1695
        %v1852 = vpop.f32.mrb[0].mxu0
        %v1853 = vadd.f32 0.0, %v1852
        %v1854 = vpop.f32.mrb[0].mxu0
        %v1855 = vpop.f32.mrb[0].mxu0
        %v1856 = vadd.f32 0.0, %v1855
        %v1857 = vpop.f32.mrb[0].mxu0
        %1858 = vmatprep.mubr.bf16.mxu0 0
        %1859 = vmatmul.mubr.bf16.gmra.mrb[0].mxu0 %v1696
        %v1860 = vpop.f32.mrb[0].mxu0
        %v1861 = vadd.f32 0.0, %v1860
        %v1862 = vpop.f32.mrb[0].mxu0
        %v1863 = vpop.f32.mrb[0].mxu0
        %v1864 = vadd.f32 0.0, %v1863
        %v1865 = vpop.f32.mrb[0].mxu0
        %1866 = vdwg.mxu0
        %1867 = vmatprep.subr.bf16.mxu0 0
        %1868 = vmatpush1.bf16.xpose.msra.mxu0 %v1713
        %1869 = vmatprep.subr.bf16.mxu0 0
        %1870 = vmatpush1.bf16.xpose.msra.mxu0 %v1714
        %1871 = vmatprep.subr.bf16.mxu0 0
        %1872 = vmatpush1.bf16.xpose.msra.mxu0 %v1715
        %1873 = vmatprep.subr.bf16.mxu0 0
        %1874 = vmatpush1.bf16.xpose.msra.mxu0 %v1716
        %1875 = vmatprep.subr.bf16.mxu0 0
        %1876 = vmatpush1.bf16.xpose.msra.mxu0 0
        %1877 = vmatprep.subr.bf16.mxu0 0
        %1878 = vmatpush1.bf16.xpose.msra.mxu0 0
        %1879 = vmatprep.subr.bf16.mxu0 0
        %1880 = vmatpush1.bf16.xpose.msra.mxu0 0
        %1881 = vmatprep.subr.bf16.mxu0 0
        %1882 = vmatpush1.bf16.xpose.msra.mxu0 0
        %1883 = vmatprep.subr.bf16.mxu0 0
        %1884 = vmatpush1.bf16.xpose.msra.mxu0 0
        %1885 = vmatprep.subr.bf16.mxu0 0
        %1886 = vmatpush1.bf16.xpose.msra.mxu0 0
        %1887 = vmatprep.subr.bf16.mxu0 0
        %1888 = vmatpush1.bf16.xpose.msra.mxu0 0
        %1889 = vmatprep.subr.bf16.mxu0 0
        %1890 = vmatpush1.bf16.xpose.msra.mxu0 0
        %1891 = vmatprep.subr.bf16.mxu0 0
        %1892 = vmatpush1.bf16.xpose.msra.mxu0 0
        %1893 = vmatprep.subr.bf16.mxu0 0
        %1894 = vmatpush1.bf16.xpose.msra.mxu0 0
        %1895 = vmatprep.subr.bf16.mxu0 0
        %1896 = vmatpush1.bf16.xpose.msra.mxu0 0
        %1897 = vmatprep.subr.bf16.mxu0 0
        %1898 = vmatpush1.bf16.xpose.msra.mxu0 0
        %1899 = vmatprep.mubr.bf16.mxu0 0
        %1900 = vmatmul.mubr.bf16.gmra.mrb[0].mxu0 %v1697
        %v1901 = vpop.f32.mrb[0].mxu0
        %v1902 = vadd.f32 0.0, %v1901
        %v1903 = vpop.f32.mrb[0].mxu0
        %v1904 = vpop.f32.mrb[0].mxu0
        %v1905 = vadd.f32 0.0, %v1904
        %v1906 = vpop.f32.mrb[0].mxu0
        %1907 = vmatprep.mubr.bf16.mxu0 0
        %1908 = vmatmul.mubr.bf16.gmra.mrb[0].mxu0 %v1698
        %v1909 = vpop.f32.mrb[0].mxu0
        %v1910 = vadd.f32 0.0, %v1909
        %v1911 = vpop.f32.mrb[0].mxu0
        %v1912 = vpop.f32.mrb[0].mxu0
        %v1913 = vadd.f32 0.0, %v1912
        %v1914 = vpop.f32.mrb[0].mxu0
        %1915 = vmatprep.mubr.bf16.mxu0 0
        %1916 = vmatmul.mubr.bf16.gmra.mrb[0].mxu0 %v1699
        %v1917 = vpop.f32.mrb[0].mxu0
        %v1918 = vadd.f32 0.0, %v1917
        %v1919 = vpop.f32.mrb[0].mxu0
        %v1920 = vpop.f32.mrb[0].mxu0
        %v1921 = vadd.f32 0.0, %v1920
        %v1922 = vpop.f32.mrb[0].mxu0
        %1923 = vmatprep.mubr.bf16.mxu0 0
        %1924 = vmatmul.mubr.bf16.gmra.mrb[0].mxu0 %v1700
        %v1925 = vpop.f32.mrb[0].mxu0
        %v1926 = vadd.f32 0.0, %v1925
        %v1927 = vpop.f32.mrb[0].mxu0
        %v1928 = vpop.f32.mrb[0].mxu0
        %v1929 = vadd.f32 0.0, %v1928
        %v1930 = vpop.f32.mrb[0].mxu0
        %1931 = vdwg.mxu0
        %1932 = vmatprep.subr.bf16.mxu0 0
        %1933 = vmatpush1.bf16.xpose.msra.mxu0 %v1717
        %1934 = vmatprep.subr.bf16.mxu0 0
        %1935 = vmatpush1.bf16.xpose.msra.mxu0 %v1718
        %1936 = vmatprep.subr.bf16.mxu0 0
        %1937 = vmatpush1.bf16.xpose.msra.mxu0 %v1719
        %1938 = vmatprep.subr.bf16.mxu0 0
        %1939 = vmatpush1.bf16.xpose.msra.mxu0 %v1720
        %1940 = vmatprep.subr.bf16.mxu0 0
        %1941 = vmatpush1.bf16.xpose.msra.mxu0 0
        %1942 = vmatprep.subr.bf16.mxu0 0
        %1943 = vmatpush1.bf16.xpose.msra.mxu0 0
        %1944 = vmatprep.subr.bf16.mxu0 0
        %1945 = vmatpush1.bf16.xpose.msra.mxu0 0
        %1946 = vmatprep.subr.bf16.mxu0 0
        %1947 = vmatpush1.bf16.xpose.msra.mxu0 0
        %1948 = vmatprep.subr.bf16.mxu0 0
        %1949 = vmatpush1.bf16.xpose.msra.mxu0 0
        %1950 = vmatprep.subr.bf16.mxu0 0
        %1951 = vmatpush1.bf16.xpose.msra.mxu0 0
        %1952 = vmatprep.subr.bf16.mxu0 0
        %1953 = vmatpush1.bf16.xpose.msra.mxu0 0
        %1954 = vmatprep.subr.bf16.mxu0 0
        %1955 = vmatpush1.bf16.xpose.msra.mxu0 0
        %1956 = vmatprep.subr.bf16.mxu0 0
        %1957 = vmatpush1.bf16.xpose.msra.mxu0 0
        %1958 = vmatprep.subr.bf16.mxu0 0
        %1959 = vmatpush1.bf16.xpose.msra.mxu0 0
        %1960 = vmatprep.subr.bf16.mxu0 0
        %1961 = vmatpush1.bf16.xpose.msra.mxu0 0
        %1962 = vmatprep.subr.bf16.mxu0 0
        %1963 = vmatpush1.bf16.xpose.msra.mxu0 0
        %1964 = vmatprep.mubr.bf16.mxu0 0
        %1965 = vmatmul.mubr.bf16.gmra.mrb[0].mxu0 %v1701
        %v1966 = vpop.f32.mrb[0].mxu0
        %v1967 = vadd.f32 0.0, %v1966
        %v1968 = vpop.f32.mrb[0].mxu0
        %v1969 = vpop.f32.mrb[0].mxu0
        %v1970 = vadd.f32 0.0, %v1969
        %v1971 = vpop.f32.mrb[0].mxu0
        %1972 = vmatprep.mubr.bf16.mxu0 0
        %1973 = vmatmul.mubr.bf16.gmra.mrb[0].mxu0 %v1702
        %v1974 = vpop.f32.mrb[0].mxu0
        %v1975 = vadd.f32 0.0, %v1974
        %v1976 = vpop.f32.mrb[0].mxu0
        %v1977 = vpop.f32.mrb[0].mxu0
        %v1978 = vadd.f32 0.0, %v1977
        %v1979 = vpop.f32.mrb[0].mxu0
        %1980 = vmatprep.mubr.bf16.mxu0 0
        %1981 = vmatmul.mubr.bf16.gmra.mrb[0].mxu0 %v1703
        %v1982 = vpop.f32.mrb[0].mxu0
        %v1983 = vadd.f32 0.0, %v1982
        %v1984 = vpop.f32.mrb[0].mxu0
        %v1985 = vpop.f32.mrb[0].mxu0
        %v1986 = vadd.f32 0.0, %v1985
        %v1987 = vpop.f32.mrb[0].mxu0
        %1988 = vmatprep.mubr.bf16.mxu0 0
        %1989 = vmatmul.mubr.bf16.gmra.mrb[0].mxu0 %v1704
        %v1990 = vpop.f32.mrb[0].mxu0
        %v1991 = vadd.f32 0.0, %v1990
        %v1992 = vpop.f32.mrb[0].mxu0
        %v1993 = vpop.f32.mrb[0].mxu0
        %v1994 = vadd.f32 0.0, %v1993
        %v1995 = vpop.f32.mrb[0].mxu0
        %1996 = vdwg.mxu0
        %v1997 = vlaneseq
        %v1998 = vshrl.u32 %v1997, 7
        %v1999 = vadd.s32 %v1998, 8
        %v2000 = vadd.s32 %v1998, 16
        %v2001 = vadd.s32 %v1998, 24
        %v2002 = vadd.s32 %v1998, 32
        %v2003 = vadd.s32 %v1998, 40
        %v2004 = vadd.s32 %v1998, 48
        %v2005 = vadd.s32 %v1998, 56
        %v2006 = vlaneseq
        %v2007 = vand.u32 %v2006, 127
        %vm2008 = vcmp.le.s32.totalorder %v2007, %v1998
        %vm2009 = vcmp.le.s32.totalorder %v2007, %v1999
        %vm2010 = vcmp.le.s32.totalorder %v2007, %v2000
        %vm2011 = vcmp.le.s32.totalorder %v2007, %v2001
        %vm2012 = vcmp.le.s32.totalorder %v2007, %v2002
        %vm2013 = vcmp.le.s32.totalorder %v2007, %v2003
        %vm2014 = vcmp.le.s32.totalorder %v2007, %v2004
        %vm2015 = vcmp.le.s32.totalorder %v2007, %v2005
        %v2016 = vsel %vm2008, 1, 0
        %v2017 = vsel %vm2009, 1, 0
        %v2018 = vsel %vm2010, 1, 0
        %v2019 = vsel %vm2011, 1, 0
        %v2020 = vsel %vm2012, 1, 0
        %v2021 = vsel %vm2013, 1, 0
        %v2022 = vsel %vm2014, 1, 0
        %v2023 = vsel %vm2015, 1, 0
        %vm2024 = vcmp.eq.s32.totalorder %v2016, 1
        %vm2025 = vcmp.eq.s32.totalorder %v2017, 1
        %vm2026 = vcmp.eq.s32.totalorder %v2018, 1
        %vm2027 = vcmp.eq.s32.totalorder %v2019, 1
        %vm2028 = vcmp.eq.s32.totalorder %v2020, 1
        %vm2029 = vcmp.eq.s32.totalorder %v2021, 1
        %vm2030 = vcmp.eq.s32.totalorder %v2022, 1
        %vm2031 = vcmp.eq.s32.totalorder %v2023, 1
        %v2032 = vsel %vm2024, %v1772, -1e+30
        %v2033 = vsel %vm2025, %v1775, -1e+30
        %v2034 = vsel %vm2026, %v1780, -1e+30
        %v2035 = vsel %vm2027, %v1783, -1e+30
        %v2036 = vsel %vm2028, %v1788, -1e+30
        %v2037 = vsel %vm2029, %v1791, -1e+30
        %v2038 = vsel %vm2030, %v1796, -1e+30
        %v2039 = vsel %vm2031, %v1799, -1e+30
        %v2040 = vsel %vm2024, %v1837, -1e+30
        %v2041 = vsel %vm2025, %v1840, -1e+30
        %v2042 = vsel %vm2026, %v1845, -1e+30
        %v2043 = vsel %vm2027, %v1848, -1e+30
        %v2044 = vsel %vm2028, %v1853, -1e+30
        %v2045 = vsel %vm2029, %v1856, -1e+30
        %v2046 = vsel %vm2030, %v1861, -1e+30
        %v2047 = vsel %vm2031, %v1864, -1e+30
        %v2048 = vsel %vm2024, %v1902, -1e+30
        %v2049 = vsel %vm2025, %v1905, -1e+30
        %v2050 = vsel %vm2026, %v1910, -1e+30
        %v2051 = vsel %vm2027, %v1913, -1e+30
        %v2052 = vsel %vm2028, %v1918, -1e+30
        %v2053 = vsel %vm2029, %v1921, -1e+30
        %v2054 = vsel %vm2030, %v1926, -1e+30
        %v2055 = vsel %vm2031, %v1929, -1e+30
        %v2056 = vsel %vm2024, %v1967, -1e+30
        %v2057 = vsel %vm2025, %v1970, -1e+30
        %v2058 = vsel %vm2026, %v1975, -1e+30
        %v2059 = vsel %vm2027, %v1978, -1e+30
        %v2060 = vsel %vm2028, %v1983, -1e+30
        %v2061 = vsel %vm2029, %v1986, -1e+30
        %v2062 = vsel %vm2030, %v1991, -1e+30
        %v2063 = vsel %vm2031, %v1994, -1e+30
        %vm2064 = vcmask 523264
        %v2065 = vsel %vm2064, %v2032, -inf
        %2066 = vmax.xlane.f32.xlu0 %v2065
        %v2067 = vpop.xlane.xlu0 %2066
        %v2068 = vsel %vm2064, %v2033, -inf
        %2069 = vmax.xlane.f32.xlu0 %v2068
        %v2070 = vpop.xlane.xlu0 %2069
        %v2071 = vsel %vm2064, %v2034, -inf
        %2072 = vmax.xlane.f32.xlu0 %v2071
        %v2073 = vpop.xlane.xlu0 %2072
        %v2074 = vsel %vm2064, %v2035, -inf
        %2075 = vmax.xlane.f32.xlu0 %v2074
        %v2076 = vpop.xlane.xlu0 %2075
        %v2077 = vsel %vm2064, %v2036, -inf
        %2078 = vmax.xlane.f32.xlu0 %v2077
        %v2079 = vpop.xlane.xlu0 %2078
        %v2080 = vsel %vm2064, %v2037, -inf
        %2081 = vmax.xlane.f32.xlu0 %v2080
        %v2082 = vpop.xlane.xlu0 %2081
        %v2083 = vsel %vm2064, %v2038, -inf
        %2084 = vmax.xlane.f32.xlu0 %v2083
        %v2085 = vpop.xlane.xlu0 %2084
        %v2086 = vsel %vm2064, %v2039, -inf
        %2087 = vmax.xlane.f32.xlu0 %v2086
        %v2088 = vpop.xlane.xlu0 %2087
        %v2089 = vsel %vm2064, %v2040, -inf
        %2090 = vmax.xlane.f32.xlu0 %v2089
        %v2091 = vpop.xlane.xlu0 %2090
        %v2092 = vsel %vm2064, %v2041, -inf
        %2093 = vmax.xlane.f32.xlu0 %v2092
        %v2094 = vpop.xlane.xlu0 %2093
        %v2095 = vsel %vm2064, %v2042, -inf
        %2096 = vmax.xlane.f32.xlu0 %v2095
        %v2097 = vpop.xlane.xlu0 %2096
        %v2098 = vsel %vm2064, %v2043, -inf
        %2099 = vmax.xlane.f32.xlu0 %v2098
        %v2100 = vpop.xlane.xlu0 %2099
        %v2101 = vsel %vm2064, %v2044, -inf
        %2102 = vmax.xlane.f32.xlu0 %v2101
        %v2103 = vpop.xlane.xlu0 %2102
        %v2104 = vsel %vm2064, %v2045, -inf
        %2105 = vmax.xlane.f32.xlu0 %v2104
        %v2106 = vpop.xlane.xlu0 %2105
        %v2107 = vsel %vm2064, %v2046, -inf
        %2108 = vmax.xlane.f32.xlu0 %v2107
        %v2109 = vpop.xlane.xlu0 %2108
        %v2110 = vsel %vm2064, %v2047, -inf
        %2111 = vmax.xlane.f32.xlu0 %v2110
        %v2112 = vpop.xlane.xlu0 %2111
        %v2113 = vsel %vm2064, %v2048, -inf
        %2114 = vmax.xlane.f32.xlu0 %v2113
        %v2115 = vpop.xlane.xlu0 %2114
        %v2116 = vsel %vm2064, %v2049, -inf
        %2117 = vmax.xlane.f32.xlu0 %v2116
        %v2118 = vpop.xlane.xlu0 %2117
        %v2119 = vsel %vm2064, %v2050, -inf
        %2120 = vmax.xlane.f32.xlu0 %v2119
        %v2121 = vpop.xlane.xlu0 %2120
        %v2122 = vsel %vm2064, %v2051, -inf
        %2123 = vmax.xlane.f32.xlu0 %v2122
        %v2124 = vpop.xlane.xlu0 %2123
        %v2125 = vsel %vm2064, %v2052, -inf
        %2126 = vmax.xlane.f32.xlu0 %v2125
        %v2127 = vpop.xlane.xlu0 %2126
        %v2128 = vsel %vm2064, %v2053, -inf
        %2129 = vmax.xlane.f32.xlu0 %v2128
        %v2130 = vpop.xlane.xlu0 %2129
        %v2131 = vsel %vm2064, %v2054, -inf
        %2132 = vmax.xlane.f32.xlu0 %v2131
        %v2133 = vpop.xlane.xlu0 %2132
        %v2134 = vsel %vm2064, %v2055, -inf
        %2135 = vmax.xlane.f32.xlu0 %v2134
        %v2136 = vpop.xlane.xlu0 %2135
        %v2137 = vsel %vm2064, %v2056, -inf
        %2138 = vmax.xlane.f32.xlu0 %v2137
        %v2139 = vpop.xlane.xlu0 %2138
        %v2140 = vsel %vm2064, %v2057, -inf
        %2141 = vmax.xlane.f32.xlu0 %v2140
        %v2142 = vpop.xlane.xlu0 %2141
        %v2143 = vsel %vm2064, %v2058, -inf
        %2144 = vmax.xlane.f32.xlu0 %v2143
        %v2145 = vpop.xlane.xlu0 %2144
        %v2146 = vsel %vm2064, %v2059, -inf
        %2147 = vmax.xlane.f32.xlu0 %v2146
        %v2148 = vpop.xlane.xlu0 %2147
        %v2149 = vsel %vm2064, %v2060, -inf
        %2150 = vmax.xlane.f32.xlu0 %v2149
        %v2151 = vpop.xlane.xlu0 %2150
        %v2152 = vsel %vm2064, %v2061, -inf
        %2153 = vmax.xlane.f32.xlu0 %v2152
        %v2154 = vpop.xlane.xlu0 %2153
        %v2155 = vsel %vm2064, %v2062, -inf
        %2156 = vmax.xlane.f32.xlu0 %v2155
        %v2157 = vpop.xlane.xlu0 %2156
        %v2158 = vsel %vm2064, %v2063, -inf
        %2159 = vmax.xlane.f32.xlu0 %v2158
        %v2160 = vpop.xlane.xlu0 %2159
        %v2161 = vsub.f32 %v2032, %v2067
        %v2162 = vsub.f32 %v2033, %v2070
        %v2163 = vsub.f32 %v2034, %v2073
        %v2164 = vsub.f32 %v2035, %v2076
        %v2165 = vsub.f32 %v2036, %v2079
        %v2166 = vsub.f32 %v2037, %v2082
        %v2167 = vsub.f32 %v2038, %v2085
        %v2168 = vsub.f32 %v2039, %v2088
        %v2169 = vsub.f32 %v2040, %v2091
        %v2170 = vsub.f32 %v2041, %v2094
        %v2171 = vsub.f32 %v2042, %v2097
        %v2172 = vsub.f32 %v2043, %v2100
        %v2173 = vsub.f32 %v2044, %v2103
        %v2174 = vsub.f32 %v2045, %v2106
        %v2175 = vsub.f32 %v2046, %v2109
        %v2176 = vsub.f32 %v2047, %v2112
        %v2177 = vsub.f32 %v2048, %v2115
        %v2178 = vsub.f32 %v2049, %v2118
        %v2179 = vsub.f32 %v2050, %v2121
        %v2180 = vsub.f32 %v2051, %v2124
        %v2181 = vsub.f32 %v2052, %v2127
        %v2182 = vsub.f32 %v2053, %v2130
        %v2183 = vsub.f32 %v2054, %v2133
        %v2184 = vsub.f32 %v2055, %v2136
        %v2185 = vsub.f32 %v2056, %v2139
        %v2186 = vsub.f32 %v2057, %v2142
        %v2187 = vsub.f32 %v2058, %v2145
        %v2188 = vsub.f32 %v2059, %v2148
        %v2189 = vsub.f32 %v2060, %v2151
        %v2190 = vsub.f32 %v2061, %v2154
        %v2191 = vsub.f32 %v2062, %v2157
        %v2192 = vsub.f32 %v2063, %v2160
        %v2193 = vmul.f32 %v2161, 1.442695
        %v2194 = vpow.pop %v2193
        %v2195 = vmul.f32 %v2162, 1.442695
        %v2196 = vpow.pop %v2195
        %v2197 = vmul.f32 %v2163, 1.442695
        %v2198 = vpow.pop %v2197
        %v2199 = vmul.f32 %v2164, 1.442695
        %v2200 = vpow.pop %v2199
        %v2201 = vmul.f32 %v2165, 1.442695
        %v2202 = vpow.pop %v2201
        %v2203 = vmul.f32 %v2166, 1.442695
        %v2204 = vpow.pop %v2203
        %v2205 = vmul.f32 %v2167, 1.442695
        %v2206 = vpow.pop %v2205
        %v2207 = vmul.f32 %v2168, 1.442695
        %v2208 = vpow.pop %v2207
        %v2209 = vmul.f32 %v2169, 1.442695
        %v2210 = vpow.pop %v2209
        %v2211 = vmul.f32 %v2170, 1.442695
        %v2212 = vpow.pop %v2211
        %v2213 = vmul.f32 %v2171, 1.442695
        %v2214 = vpow.pop %v2213
        %v2215 = vmul.f32 %v2172, 1.442695
        %v2216 = vpow.pop %v2215
        %v2217 = vmul.f32 %v2173, 1.442695
        %v2218 = vpow.pop %v2217
        %v2219 = vmul.f32 %v2174, 1.442695
        %v2220 = vpow.pop %v2219
        %v2221 = vmul.f32 %v2175, 1.442695
        %v2222 = vpow.pop %v2221
        %v2223 = vmul.f32 %v2176, 1.442695
        %v2224 = vpow.pop %v2223
        %v2225 = vmul.f32 %v2177, 1.442695
        %v2226 = vpow.pop %v2225
        %v2227 = vmul.f32 %v2178, 1.442695
        %v2228 = vpow.pop %v2227
        %v2229 = vmul.f32 %v2179, 1.442695
        %v2230 = vpow.pop %v2229
        %v2231 = vmul.f32 %v2180, 1.442695
        %v2232 = vpow.pop %v2231
        %v2233 = vmul.f32 %v2181, 1.442695
        %v2234 = vpow.pop %v2233
        %v2235 = vmul.f32 %v2182, 1.442695
        %v2236 = vpow.pop %v2235
        %v2237 = vmul.f32 %v2183, 1.442695
        %v2238 = vpow.pop %v2237
        %v2239 = vmul.f32 %v2184, 1.442695
        %v2240 = vpow.pop %v2239
        %v2241 = vmul.f32 %v2185, 1.442695
        %v2242 = vpow.pop %v2241
        %v2243 = vmul.f32 %v2186, 1.442695
        %v2244 = vpow.pop %v2243
        %v2245 = vmul.f32 %v2187, 1.442695
        %v2246 = vpow.pop %v2245
        %v2247 = vmul.f32 %v2188, 1.442695
        %v2248 = vpow.pop %v2247
        %v2249 = vmul.f32 %v2189, 1.442695
        %v2250 = vpow.pop %v2249
        %v2251 = vmul.f32 %v2190, 1.442695
        %v2252 = vpow.pop %v2251
        %v2253 = vmul.f32 %v2191, 1.442695
        %v2254 = vpow.pop %v2253
        %v2255 = vmul.f32 %v2192, 1.442695
        %v2256 = vpow.pop %v2255
        %v2257 = vsel %vm2064, %v2194, 0.0
        %2258 = vadd.xlane.f32.xlu0 %v2257
        %v2259 = vpop.xlane.xlu0 %2258
        %v2260 = vsel %vm2064, %v2196, 0.0
        %2261 = vadd.xlane.f32.xlu0 %v2260
        %v2262 = vpop.xlane.xlu0 %2261
        %v2263 = vsel %vm2064, %v2198, 0.0
        %2264 = vadd.xlane.f32.xlu0 %v2263
        %v2265 = vpop.xlane.xlu0 %2264
        %v2266 = vsel %vm2064, %v2200, 0.0
        %2267 = vadd.xlane.f32.xlu0 %v2266
        %v2268 = vpop.xlane.xlu0 %2267
        %v2269 = vsel %vm2064, %v2202, 0.0
        %2270 = vadd.xlane.f32.xlu0 %v2269
        %v2271 = vpop.xlane.xlu0 %2270
        %v2272 = vsel %vm2064, %v2204, 0.0
        %2273 = vadd.xlane.f32.xlu0 %v2272
        %v2274 = vpop.xlane.xlu0 %2273
        %v2275 = vsel %vm2064, %v2206, 0.0
        %2276 = vadd.xlane.f32.xlu0 %v2275
        %v2277 = vpop.xlane.xlu0 %2276
        %v2278 = vsel %vm2064, %v2208, 0.0
        %2279 = vadd.xlane.f32.xlu0 %v2278
        %v2280 = vpop.xlane.xlu0 %2279
        %v2281 = vsel %vm2064, %v2210, 0.0
        %2282 = vadd.xlane.f32.xlu0 %v2281
        %v2283 = vpop.xlane.xlu0 %2282
        %v2284 = vsel %vm2064, %v2212, 0.0
        %2285 = vadd.xlane.f32.xlu0 %v2284
        %v2286 = vpop.xlane.xlu0 %2285
        %v2287 = vsel %vm2064, %v2214, 0.0
        %2288 = vadd.xlane.f32.xlu0 %v2287
        %v2289 = vpop.xlane.xlu0 %2288
        %v2290 = vsel %vm2064, %v2216, 0.0
        %2291 = vadd.xlane.f32.xlu0 %v2290
        %v2292 = vpop.xlane.xlu0 %2291
        %v2293 = vsel %vm2064, %v2218, 0.0
        %2294 = vadd.xlane.f32.xlu0 %v2293
        %v2295 = vpop.xlane.xlu0 %2294
        %v2296 = vsel %vm2064, %v2220, 0.0
        %2297 = vadd.xlane.f32.xlu0 %v2296
        %v2298 = vpop.xlane.xlu0 %2297
        %v2299 = vsel %vm2064, %v2222, 0.0
        %2300 = vadd.xlane.f32.xlu0 %v2299
        %v2301 = vpop.xlane.xlu0 %2300
        %v2302 = vsel %vm2064, %v2224, 0.0
        %2303 = vadd.xlane.f32.xlu0 %v2302
        %v2304 = vpop.xlane.xlu0 %2303
        %v2305 = vsel %vm2064, %v2226, 0.0
        %2306 = vadd.xlane.f32.xlu0 %v2305
        %v2307 = vpop.xlane.xlu0 %2306
        %v2308 = vsel %vm2064, %v2228, 0.0
        %2309 = vadd.xlane.f32.xlu0 %v2308
        %v2310 = vpop.xlane.xlu0 %2309
        %v2311 = vsel %vm2064, %v2230, 0.0
        %2312 = vadd.xlane.f32.xlu0 %v2311
        %v2313 = vpop.xlane.xlu0 %2312
        %v2314 = vsel %vm2064, %v2232, 0.0
        %2315 = vadd.xlane.f32.xlu0 %v2314
        %v2316 = vpop.xlane.xlu0 %2315
        %v2317 = vsel %vm2064, %v2234, 0.0
        %2318 = vadd.xlane.f32.xlu0 %v2317
        %v2319 = vpop.xlane.xlu0 %2318
        %v2320 = vsel %vm2064, %v2236, 0.0
        %2321 = vadd.xlane.f32.xlu0 %v2320
        %v2322 = vpop.xlane.xlu0 %2321
        %v2323 = vsel %vm2064, %v2238, 0.0
        %2324 = vadd.xlane.f32.xlu0 %v2323
        %v2325 = vpop.xlane.xlu0 %2324
        %v2326 = vsel %vm2064, %v2240, 0.0
        %2327 = vadd.xlane.f32.xlu0 %v2326
        %v2328 = vpop.xlane.xlu0 %2327
        %v2329 = vsel %vm2064, %v2242, 0.0
        %2330 = vadd.xlane.f32.xlu0 %v2329
        %v2331 = vpop.xlane.xlu0 %2330
        %v2332 = vsel %vm2064, %v2244, 0.0
        %2333 = vadd.xlane.f32.xlu0 %v2332
        %v2334 = vpop.xlane.xlu0 %2333
        %v2335 = vsel %vm2064, %v2246, 0.0
        %2336 = vadd.xlane.f32.xlu0 %v2335
        %v2337 = vpop.xlane.xlu0 %2336
        %v2338 = vsel %vm2064, %v2248, 0.0
        %2339 = vadd.xlane.f32.xlu0 %v2338
        %v2340 = vpop.xlane.xlu0 %2339
        %v2341 = vsel %vm2064, %v2250, 0.0
        %2342 = vadd.xlane.f32.xlu0 %v2341
        %v2343 = vpop.xlane.xlu0 %2342
        %v2344 = vsel %vm2064, %v2252, 0.0
        %2345 = vadd.xlane.f32.xlu0 %v2344
        %v2346 = vpop.xlane.xlu0 %2345
        %v2347 = vsel %vm2064, %v2254, 0.0
        %2348 = vadd.xlane.f32.xlu0 %v2347
        %v2349 = vpop.xlane.xlu0 %2348
        %v2350 = vsel %vm2064, %v2256, 0.0
        %2351 = vadd.xlane.f32.xlu0 %v2350
        %v2352 = vpop.xlane.xlu0 %2351
        %v2353 = vpack.c.bf16 %v2196, %v2194
        %v2354 = vpack.c.bf16 %v2200, %v2198
        %v2355 = vpack.c.bf16 %v2204, %v2202
        %v2356 = vpack.c.bf16 %v2208, %v2206
        %v2357 = vpack.c.bf16 %v2212, %v2210
        %v2358 = vpack.c.bf16 %v2216, %v2214
        %v2359 = vpack.c.bf16 %v2220, %v2218
        %v2360 = vpack.c.bf16 %v2224, %v2222
        %v2361 = vpack.c.bf16 %v2228, %v2226
        %v2362 = vpack.c.bf16 %v2232, %v2230
        %v2363 = vpack.c.bf16 %v2236, %v2234
        %v2364 = vpack.c.bf16 %v2240, %v2238
        %v2365 = vpack.c.bf16 %v2244, %v2242
        %v2366 = vpack.c.bf16 %v2248, %v2246
        %v2367 = vpack.c.bf16 %v2252, %v2250
        %v2368 = vpack.c.bf16 %v2256, %v2254
        %v2370 = vsel %vm2064, %v2353, 0
        %v2373 = vsel %vm2064, %v2354, 0
        %v2376 = vsel %vm2064, %v2355, 0
        %v2379 = vsel %vm2064, %v2356, 0
        %2381 = vmatprep.subr.bf16.mxu0 0
        %2382 = vmatpush1.bf16.msra.mxu0 %v1721
        %2383 = vmatprep.subr.bf16.mxu0 0
        %2384 = vmatpush1.bf16.msra.mxu0 %v1722
        %2385 = vmatprep.subr.bf16.mxu0 0
        %2386 = vmatpush1.bf16.msra.mxu0 %v1723
        %2387 = vmatprep.subr.bf16.mxu0 0
        %2388 = vmatpush1.bf16.msra.mxu0 %v1724
        %2389 = vmatprep.subr.bf16.mxu0 0
        %2390 = vmatpush1.bf16.msra.mxu0 0
        %2391 = vmatprep.subr.bf16.mxu0 0
        %2392 = vmatpush1.bf16.msra.mxu0 0
        %2393 = vmatprep.subr.bf16.mxu0 0
        %2394 = vmatpush1.bf16.msra.mxu0 0
        %2395 = vmatprep.subr.bf16.mxu0 0
        %2396 = vmatpush1.bf16.msra.mxu0 0
        %2397 = vmatprep.subr.bf16.mxu0 0
        %2398 = vmatpush1.bf16.msra.mxu0 0
        %2399 = vmatprep.subr.bf16.mxu0 0
        %2400 = vmatpush1.bf16.msra.mxu0 0
        %2401 = vmatprep.subr.bf16.mxu0 0
        %2402 = vmatpush1.bf16.msra.mxu0 0
        %2403 = vmatprep.subr.bf16.mxu0 0
        %2404 = vmatpush1.bf16.msra.mxu0 0
        %2405 = vmatprep.subr.bf16.mxu0 0
        %2406 = vmatpush1.bf16.msra.mxu0 0
        %2407 = vmatprep.subr.bf16.mxu0 0
        %2408 = vmatpush1.bf16.msra.mxu0 0
        %2409 = vmatprep.subr.bf16.mxu0 0
        %2410 = vmatpush1.bf16.msra.mxu0 0
        %2411 = vmatprep.subr.bf16.mxu0 0
        %2412 = vmatpush1.bf16.msra.mxu0 0
        %2413 = vmatprep.mubr.bf16.mxu0 0
        %2414 = vmatmul.mubr.bf16.gmra.mrb[0].mxu0 %v2370
        %v2415 = vpop.f32.mrb[0].mxu0
        %v2416 = vadd.f32 0.0, %v2415
        %v2417 = vpop.f32.mrb[0].mxu0
        %v2418 = vpop.f32.mrb[0].mxu0
        %v2419 = vadd.f32 0.0, %v2418
        %v2420 = vpop.f32.mrb[0].mxu0
        %2421 = vmatprep.mubr.bf16.mxu0 0
        %2422 = vmatmul.mubr.bf16.gmra.mrb[0].mxu0 %v2373
        %v2423 = vpop.f32.mrb[0].mxu0
        %v2424 = vadd.f32 0.0, %v2423
        %v2425 = vpop.f32.mrb[0].mxu0
        %v2426 = vpop.f32.mrb[0].mxu0
        %v2427 = vadd.f32 0.0, %v2426
        %v2428 = vpop.f32.mrb[0].mxu0
        %2429 = vmatprep.mubr.bf16.mxu0 0
        %2430 = vmatmul.mubr.bf16.gmra.mrb[0].mxu0 %v2376
        %v2431 = vpop.f32.mrb[0].mxu0
        %v2432 = vadd.f32 0.0, %v2431
        %v2433 = vpop.f32.mrb[0].mxu0
        %v2434 = vpop.f32.mrb[0].mxu0
        %v2435 = vadd.f32 0.0, %v2434
        %v2436 = vpop.f32.mrb[0].mxu0
        %2437 = vmatprep.mubr.bf16.mxu0 0
        %2438 = vmatmul.mubr.bf16.gmra.mrb[0].mxu0 %v2379
        %v2439 = vpop.f32.mrb[0].mxu0
        %v2440 = vadd.f32 0.0, %v2439
        %v2441 = vpop.f32.mrb[0].mxu0
        %v2442 = vpop.f32.mrb[0].mxu0
        %v2443 = vadd.f32 0.0, %v2442
        %v2444 = vpop.f32.mrb[0].mxu0
        %2445 = vdwg.mxu0
        %v2447 = vsel %vm2064, %v2357, 0
        %v2450 = vsel %vm2064, %v2358, 0
        %v2453 = vsel %vm2064, %v2359, 0
        %v2456 = vsel %vm2064, %v2360, 0
        %2458 = vmatprep.subr.bf16.mxu0 0
        %2459 = vmatpush1.bf16.msra.mxu0 %v1725
        %2460 = vmatprep.subr.bf16.mxu0 0
        %2461 = vmatpush1.bf16.msra.mxu0 %v1726
        %2462 = vmatprep.subr.bf16.mxu0 0
        %2463 = vmatpush1.bf16.msra.mxu0 %v1727
        %2464 = vmatprep.subr.bf16.mxu0 0
        %2465 = vmatpush1.bf16.msra.mxu0 %v1728
        %2466 = vmatprep.subr.bf16.mxu0 0
        %2467 = vmatpush1.bf16.msra.mxu0 0
        %2468 = vmatprep.subr.bf16.mxu0 0
        %2469 = vmatpush1.bf16.msra.mxu0 0
        %2470 = vmatprep.subr.bf16.mxu0 0
        %2471 = vmatpush1.bf16.msra.mxu0 0
        %2472 = vmatprep.subr.bf16.mxu0 0
        %2473 = vmatpush1.bf16.msra.mxu0 0
        %2474 = vmatprep.subr.bf16.mxu0 0
        %2475 = vmatpush1.bf16.msra.mxu0 0
        %2476 = vmatprep.subr.bf16.mxu0 0
        %2477 = vmatpush1.bf16.msra.mxu0 0
        %2478 = vmatprep.subr.bf16.mxu0 0
        %2479 = vmatpush1.bf16.msra.mxu0 0
        %2480 = vmatprep.subr.bf16.mxu0 0
        %2481 = vmatpush1.bf16.msra.mxu0 0
        %2482 = vmatprep.subr.bf16.mxu0 0
        %2483 = vmatpush1.bf16.msra.mxu0 0
        %2484 = vmatprep.subr.bf16.mxu0 0
        %2485 = vmatpush1.bf16.msra.mxu0 0
        %2486 = vmatprep.subr.bf16.mxu0 0
        %2487 = vmatpush1.bf16.msra.mxu0 0
        %2488 = vmatprep.subr.bf16.mxu0 0
        %2489 = vmatpush1.bf16.msra.mxu0 0
        %2490 = vmatprep.mubr.bf16.mxu0 0
        %2491 = vmatmul.mubr.bf16.gmra.mrb[0].mxu0 %v2447
        %v2492 = vpop.f32.mrb[0].mxu0
        %v2493 = vadd.f32 0.0, %v2492
        %v2494 = vpop.f32.mrb[0].mxu0
        %v2495 = vpop.f32.mrb[0].mxu0
        %v2496 = vadd.f32 0.0, %v2495
        %v2497 = vpop.f32.mrb[0].mxu0
        %2498 = vmatprep.mubr.bf16.mxu0 0
        %2499 = vmatmul.mubr.bf16.gmra.mrb[0].mxu0 %v2450
        %v2500 = vpop.f32.mrb[0].mxu0
        %v2501 = vadd.f32 0.0, %v2500
        %v2502 = vpop.f32.mrb[0].mxu0
        %v2503 = vpop.f32.mrb[0].mxu0
        %v2504 = vadd.f32 0.0, %v2503
        %v2505 = vpop.f32.mrb[0].mxu0
        %2506 = vmatprep.mubr.bf16.mxu0 0
        %2507 = vmatmul.mubr.bf16.gmra.mrb[0].mxu0 %v2453
        %v2508 = vpop.f32.mrb[0].mxu0
        %v2509 = vadd.f32 0.0, %v2508
        %v2510 = vpop.f32.mrb[0].mxu0
        %v2511 = vpop.f32.mrb[0].mxu0
        %v2512 = vadd.f32 0.0, %v2511
        %v2513 = vpop.f32.mrb[0].mxu0
        %2514 = vmatprep.mubr.bf16.mxu0 0
        %2515 = vmatmul.mubr.bf16.gmra.mrb[0].mxu0 %v2456
        %v2516 = vpop.f32.mrb[0].mxu0
        %v2517 = vadd.f32 0.0, %v2516
        %v2518 = vpop.f32.mrb[0].mxu0
        %v2519 = vpop.f32.mrb[0].mxu0
        %v2520 = vadd.f32 0.0, %v2519
        %v2521 = vpop.f32.mrb[0].mxu0
        %2522 = vdwg.mxu0
        %v2524 = vsel %vm2064, %v2361, 0
        %v2527 = vsel %vm2064, %v2362, 0
        %v2530 = vsel %vm2064, %v2363, 0
        %v2533 = vsel %vm2064, %v2364, 0
        %2535 = vmatprep.subr.bf16.mxu0 0
        %2536 = vmatpush1.bf16.msra.mxu0 %v1729
        %2537 = vmatprep.subr.bf16.mxu0 0
        %2538 = vmatpush1.bf16.msra.mxu0 %v1730
        %2539 = vmatprep.subr.bf16.mxu0 0
        %2540 = vmatpush1.bf16.msra.mxu0 %v1731
        %2541 = vmatprep.subr.bf16.mxu0 0
        %2542 = vmatpush1.bf16.msra.mxu0 %v1732
        %2543 = vmatprep.subr.bf16.mxu0 0
        %2544 = vmatpush1.bf16.msra.mxu0 0
        %2545 = vmatprep.subr.bf16.mxu0 0
        %2546 = vmatpush1.bf16.msra.mxu0 0
        %2547 = vmatprep.subr.bf16.mxu0 0
        %2548 = vmatpush1.bf16.msra.mxu0 0
        %2549 = vmatprep.subr.bf16.mxu0 0
        %2550 = vmatpush1.bf16.msra.mxu0 0
        %2551 = vmatprep.subr.bf16.mxu0 0
        %2552 = vmatpush1.bf16.msra.mxu0 0
        %2553 = vmatprep.subr.bf16.mxu0 0
        %2554 = vmatpush1.bf16.msra.mxu0 0
        %2555 = vmatprep.subr.bf16.mxu0 0
        %2556 = vmatpush1.bf16.msra.mxu0 0
        %2557 = vmatprep.subr.bf16.mxu0 0
        %2558 = vmatpush1.bf16.msra.mxu0 0
        %2559 = vmatprep.subr.bf16.mxu0 0
        %2560 = vmatpush1.bf16.msra.mxu0 0
        %2561 = vmatprep.subr.bf16.mxu0 0
        %2562 = vmatpush1.bf16.msra.mxu0 0
        %2563 = vmatprep.subr.bf16.mxu0 0
        %2564 = vmatpush1.bf16.msra.mxu0 0
        %2565 = vmatprep.subr.bf16.mxu0 0
        %2566 = vmatpush1.bf16.msra.mxu0 0
        %2567 = vmatprep.mubr.bf16.mxu0 0
        %2568 = vmatmul.mubr.bf16.gmra.mrb[0].mxu0 %v2524
        %v2569 = vpop.f32.mrb[0].mxu0
        %v2570 = vadd.f32 0.0, %v2569
        %v2571 = vpop.f32.mrb[0].mxu0
        %v2572 = vpop.f32.mrb[0].mxu0
        %v2573 = vadd.f32 0.0, %v2572
        %v2574 = vpop.f32.mrb[0].mxu0
        %2575 = vmatprep.mubr.bf16.mxu0 0
        %2576 = vmatmul.mubr.bf16.gmra.mrb[0].mxu0 %v2527
        %v2577 = vpop.f32.mrb[0].mxu0
        %v2578 = vadd.f32 0.0, %v2577
        %v2579 = vpop.f32.mrb[0].mxu0
        %v2580 = vpop.f32.mrb[0].mxu0
        %v2581 = vadd.f32 0.0, %v2580
        %v2582 = vpop.f32.mrb[0].mxu0
        %2583 = vmatprep.mubr.bf16.mxu0 0
        %2584 = vmatmul.mubr.bf16.gmra.mrb[0].mxu0 %v2530
        %v2585 = vpop.f32.mrb[0].mxu0
        %v2586 = vadd.f32 0.0, %v2585
        %v2587 = vpop.f32.mrb[0].mxu0
        %v2588 = vpop.f32.mrb[0].mxu0
        %v2589 = vadd.f32 0.0, %v2588
        %v2590 = vpop.f32.mrb[0].mxu0
        %2591 = vmatprep.mubr.bf16.mxu0 0
        %2592 = vmatmul.mubr.bf16.gmra.mrb[0].mxu0 %v2533
        %v2593 = vpop.f32.mrb[0].mxu0
        %v2594 = vadd.f32 0.0, %v2593
        %v2595 = vpop.f32.mrb[0].mxu0
        %v2596 = vpop.f32.mrb[0].mxu0
        %v2597 = vadd.f32 0.0, %v2596
        %v2598 = vpop.f32.mrb[0].mxu0
        %2599 = vdwg.mxu0
        %v2601 = vsel %vm2064, %v2365, 0
        %v2604 = vsel %vm2064, %v2366, 0
        %v2607 = vsel %vm2064, %v2367, 0
        %v2610 = vsel %vm2064, %v2368, 0
        %2612 = vmatprep.subr.bf16.mxu0 0
        %2613 = vmatpush1.bf16.msra.mxu0 %v1733
        %2614 = vmatprep.subr.bf16.mxu0 0
        %2615 = vmatpush1.bf16.msra.mxu0 %v1734
        %2616 = vmatprep.subr.bf16.mxu0 0
        %2617 = vmatpush1.bf16.msra.mxu0 %v1735
        %2618 = vmatprep.subr.bf16.mxu0 0
        %2619 = vmatpush1.bf16.msra.mxu0 %v1736
        %2620 = vmatprep.subr.bf16.mxu0 0
        %2621 = vmatpush1.bf16.msra.mxu0 0
        %2622 = vmatprep.subr.bf16.mxu0 0
        %2623 = vmatpush1.bf16.msra.mxu0 0
        %2624 = vmatprep.subr.bf16.mxu0 0
        %2625 = vmatpush1.bf16.msra.mxu0 0
        %2626 = vmatprep.subr.bf16.mxu0 0
        %2627 = vmatpush1.bf16.msra.mxu0 0
        %2628 = vmatprep.subr.bf16.mxu0 0
        %2629 = vmatpush1.bf16.msra.mxu0 0
        %2630 = vmatprep.subr.bf16.mxu0 0
        %2631 = vmatpush1.bf16.msra.mxu0 0
        %2632 = vmatprep.subr.bf16.mxu0 0
        %2633 = vmatpush1.bf16.msra.mxu0 0
        %2634 = vmatprep.subr.bf16.mxu0 0
        %2635 = vmatpush1.bf16.msra.mxu0 0
        %2636 = vmatprep.subr.bf16.mxu0 0
        %2637 = vmatpush1.bf16.msra.mxu0 0
        %2638 = vmatprep.subr.bf16.mxu0 0
        %2639 = vmatpush1.bf16.msra.mxu0 0
        %2640 = vmatprep.subr.bf16.mxu0 0
        %2641 = vmatpush1.bf16.msra.mxu0 0
        %2642 = vmatprep.subr.bf16.mxu0 0
        %2643 = vmatpush1.bf16.msra.mxu0 0
        %2644 = vmatprep.mubr.bf16.mxu0 0
        %2645 = vmatmul.mubr.bf16.gmra.mrb[0].mxu0 %v2601
        %v2646 = vpop.f32.mrb[0].mxu0
        %v2647 = vadd.f32 0.0, %v2646
        %v2648 = vpop.f32.mrb[0].mxu0
        %v2649 = vpop.f32.mrb[0].mxu0
        %v2650 = vadd.f32 0.0, %v2649
        %v2651 = vpop.f32.mrb[0].mxu0
        %2652 = vmatprep.mubr.bf16.mxu0 0
        %2653 = vmatmul.mubr.bf16.gmra.mrb[0].mxu0 %v2604
        %v2654 = vpop.f32.mrb[0].mxu0
        %v2655 = vadd.f32 0.0, %v2654
        %v2656 = vpop.f32.mrb[0].mxu0
        %v2657 = vpop.f32.mrb[0].mxu0
        %v2658 = vadd.f32 0.0, %v2657
        %v2659 = vpop.f32.mrb[0].mxu0
        %2660 = vmatprep.mubr.bf16.mxu0 0
        %2661 = vmatmul.mubr.bf16.gmra.mrb[0].mxu0 %v2607
        %v2662 = vpop.f32.mrb[0].mxu0
        %v2663 = vadd.f32 0.0, %v2662
        %v2664 = vpop.f32.mrb[0].mxu0
        %v2665 = vpop.f32.mrb[0].mxu0
        %v2666 = vadd.f32 0.0, %v2665
        %v2667 = vpop.f32.mrb[0].mxu0
        %2668 = vmatprep.mubr.bf16.mxu0 0
        %2669 = vmatmul.mubr.bf16.gmra.mrb[0].mxu0 %v2610
        %v2670 = vpop.f32.mrb[0].mxu0
        %v2671 = vadd.f32 0.0, %v2670
        %v2672 = vpop.f32.mrb[0].mxu0
        %v2673 = vpop.f32.mrb[0].mxu0
        %v2674 = vadd.f32 0.0, %v2673
        %v2675 = vpop.f32.mrb[0].mxu0
        %2676 = vdwg.mxu0
        %v2677 = vrcp.pop %v2259
        %v2678 = vrcp.pop %v2262
        %v2679 = vrcp.pop %v2265
        %v2680 = vrcp.pop %v2268
        %v2681 = vrcp.pop %v2271
        %v2682 = vrcp.pop %v2274
        %v2683 = vrcp.pop %v2277
        %v2684 = vrcp.pop %v2280
        %v2685 = vrcp.pop %v2283
        %v2686 = vrcp.pop %v2286
        %v2687 = vrcp.pop %v2289
        %v2688 = vrcp.pop %v2292
        %v2689 = vrcp.pop %v2295
        %v2690 = vrcp.pop %v2298
        %v2691 = vrcp.pop %v2301
        %v2692 = vrcp.pop %v2304
        %v2693 = vrcp.pop %v2307
        %v2694 = vrcp.pop %v2310
        %v2695 = vrcp.pop %v2313
        %v2696 = vrcp.pop %v2316
        %v2697 = vrcp.pop %v2319
        %v2698 = vrcp.pop %v2322
        %v2699 = vrcp.pop %v2325
        %v2700 = vrcp.pop %v2328
        %v2701 = vrcp.pop %v2331
        %v2702 = vrcp.pop %v2334
        %v2703 = vrcp.pop %v2337
        %v2704 = vrcp.pop %v2340
        %v2705 = vrcp.pop %v2343
        %v2706 = vrcp.pop %v2346
        %v2707 = vrcp.pop %v2349
        %v2708 = vrcp.pop %v2352
        %v2709 = vmul.f32 %v2416, %v2677
        %v2710 = vmul.f32 %v2419, %v2678
        %v2711 = vmul.f32 %v2424, %v2679
        %v2712 = vmul.f32 %v2427, %v2680
        %v2713 = vmul.f32 %v2432, %v2681
        %v2714 = vmul.f32 %v2435, %v2682
        %v2715 = vmul.f32 %v2440, %v2683
        %v2716 = vmul.f32 %v2443, %v2684
        %v2717 = vmul.f32 %v2493, %v2685
        %v2718 = vmul.f32 %v2496, %v2686
        %v2719 = vmul.f32 %v2501, %v2687
        %v2720 = vmul.f32 %v2504, %v2688
        %v2721 = vmul.f32 %v2509, %v2689
        %v2722 = vmul.f32 %v2512, %v2690
        %v2723 = vmul.f32 %v2517, %v2691
        %v2724 = vmul.f32 %v2520, %v2692
        %v2725 = vmul.f32 %v2570, %v2693
        %v2726 = vmul.f32 %v2573, %v2694
        %v2727 = vmul.f32 %v2578, %v2695
        %v2728 = vmul.f32 %v2581, %v2696
        %v2729 = vmul.f32 %v2586, %v2697
        %v2730 = vmul.f32 %v2589, %v2698
        %v2731 = vmul.f32 %v2594, %v2699
        %v2732 = vmul.f32 %v2597, %v2700
        %v2733 = vmul.f32 %v2647, %v2701
        %v2734 = vmul.f32 %v2650, %v2702
        %v2735 = vmul.f32 %v2655, %v2703
        %v2736 = vmul.f32 %v2658, %v2704
        %v2737 = vmul.f32 %v2663, %v2705
        %v2738 = vmul.f32 %v2666, %v2706
        %v2739 = vmul.f32 %v2671, %v2707
        %v2740 = vmul.f32 %v2674, %v2708
        %2741 = vst.msk [vmem:[%s177] sm:$0xff] %vm2064, %v2709
        %2742 = vst.msk [vmem:[%s177 + $0x8] sm:$0xff] %vm2064, %v2710
        %2743 = vst.msk [vmem:[%s177 + $0x10] sm:$0xff] %vm2064, %v2711
        %2744 = vst.msk [vmem:[%s177 + $0x18] sm:$0xff] %vm2064, %v2712
        %2745 = vst.msk [vmem:[%s177 + $0x20] sm:$0xff] %vm2064, %v2713
        %2746 = vst.msk [vmem:[%s177 + $0x28] sm:$0xff] %vm2064, %v2714
        %2747 = vst.msk [vmem:[%s177 + $0x30] sm:$0xff] %vm2064, %v2715
        %2748 = vst.msk [vmem:[%s177 + $0x38] sm:$0xff] %vm2064, %v2716
        %2749 = vst.msk [vmem:[%s177 + $0x40] sm:$0xff] %vm2064, %v2717
        %2750 = vst.msk [vmem:[%s177 + $0x48] sm:$0xff] %vm2064, %v2718
        %2751 = vst.msk [vmem:[%s177 + $0x50] sm:$0xff] %vm2064, %v2719
        %2752 = vst.msk [vmem:[%s177 + $0x58] sm:$0xff] %vm2064, %v2720
        %2753 = vst.msk [vmem:[%s177 + $0x60] sm:$0xff] %vm2064, %v2721
        %2754 = vst.msk [vmem:[%s177 + $0x68] sm:$0xff] %vm2064, %v2722
        %2755 = vst.msk [vmem:[%s177 + $0x70] sm:$0xff] %vm2064, %v2723
        %2756 = vst.msk [vmem:[%s177 + $0x78] sm:$0xff] %vm2064, %v2724
        %2757 = vst.msk [vmem:[%s177 + $0x80] sm:$0xff] %vm2064, %v2725
        %2758 = vst.msk [vmem:[%s177 + $0x88] sm:$0xff] %vm2064, %v2726
        %2759 = vst.msk [vmem:[%s177 + $0x90] sm:$0xff] %vm2064, %v2727
        %2760 = vst.msk [vmem:[%s177 + $0x98] sm:$0xff] %vm2064, %v2728
        %2761 = vst.msk [vmem:[%s177 + $0xa0] sm:$0xff] %vm2064, %v2729
        %2762 = vst.msk [vmem:[%s177 + $0xa8] sm:$0xff] %vm2064, %v2730
        %2763 = vst.msk [vmem:[%s177 + $0xb0] sm:$0xff] %vm2064, %v2731
        %2764 = vst.msk [vmem:[%s177 + $0xb8] sm:$0xff] %vm2064, %v2732
        %2765 = vst.msk [vmem:[%s177 + $0xc0] sm:$0xff] %vm2064, %v2733
        %2766 = vst.msk [vmem:[%s177 + $0xc8] sm:$0xff] %vm2064, %v2734
        %2767 = vst.msk [vmem:[%s177 + $0xd0] sm:$0xff] %vm2064, %v2735
        %2768 = vst.msk [vmem:[%s177 + $0xd8] sm:$0xff] %vm2064, %v2736
        %2769 = vst.msk [vmem:[%s177 + $0xe0] sm:$0xff] %vm2064, %v2737
        %2770 = vst.msk [vmem:[%s177 + $0xe8] sm:$0xff] %vm2064, %v2738
        %2771 = vst.msk [vmem:[%s177 + $0xf0] sm:$0xff] %vm2064, %v2739
        %2772 = vst.msk [vmem:[%s177 + $0xf8] sm:$0xff] %vm2064, %v2740
        %s2773 = sand.u32 %s75, 1
        %s2774 = scalar_lea.sflag [#allocation4], %s2773
        %s2775 = sand.u32 %s75, 1
        %s2776 = smul.addr %s2775, 256
        %s2777 = scalar_lea.vmem [#allocation7], %s2776
        // Predicated region
        $region37: #{tpu_custom_call.1} parent=27 // pred_check
          %p2778 = pneg %p85
        $region38: #{tpu_custom_call.1} parent=27 // pred_check_branch
          %2780 = sbr.rel (%p2778) target = $region40
        $region39: #{tpu_custom_call.1} parent=27 // pred_region
          %s2781 = smul.u32 4, %s20
          %s2783 = ssub.s32 4096, 4096
          %2784 = vsyncadd %s2774, %s2783
          %s2785 = smul.addr %s2781, 8
          %s2786 = smul.addr %s2785, 128
          %s2787 = scalar_lea.hbm %s2, %s2786
          %s2788 = sshll.u32 %s2777, 4
          %s2789 = int_to_ptr.vmem [resolvable:$true] %s2788
          %2794 = dma.vmem_to_hbm [thread:$0]  %s2789, 4096, %s2787, %s2774, 128, 128, 8
        $region40: #{tpu_custom_call.1} parent=27 // pred_fallthru
          _
      $region28: #{tpu_custom_call.1} parent=5 // pred_fallthru
        _
      %p2795 = scmp.le.s32.totalorder 2, %s15
      // Predicated region
      $region41: #{tpu_custom_call.1} parent=5 // pred_check
        %p2796 = pneg %p2795
      $region42: #{tpu_custom_call.1} parent=5 // pred_check_branch
        %2798 = sbr.rel (%p2796) target = $region44
      $region43: #{tpu_custom_call.1} parent=5 // pred_region
        %s2799 = ssub.s32 %s15, 2
        // Predicated region
        $region45: #{tpu_custom_call.1} parent=43 // pred_check
          %p2800 = pneg %p91
        $region46: #{tpu_custom_call.1} parent=43 // pred_check_branch
          %2802 = sbr.rel (%p2800) target = $region48
        $region47: #{tpu_custom_call.1} parent=43 // pred_region
          %s2803 = sand.u32 %s76, 1
          %s2804 = scalar_lea.sflag [#allocation4], %s2803
          %s2805 = sand.u32 %s76, 1
          %s2806 = smul.addr %s2805, 256
          %s2807 = scalar_lea.vmem [#allocation7], %s2806
          %2808 = dma.done %s2804, 4096
        $region48: #{tpu_custom_call.1} parent=43 // pred_fallthru
          _
      $region44: #{tpu_custom_call.1} parent=5 // pred_fallthru
        _
    $region6: #{tpu_custom_call.1} parent=1 // loop_footer
      %s19 = sadd.s32 1, %s15
    $region7: #{tpu_custom_call.1} parent=1 // loop_footer_branch
      %14 = sbr.rel target = $region3
    $region8: #{tpu_custom_call.1} parent=1 // loop_exit
      _
    %2809 = vsyncpa [#allocation3], 1
    %s2810 = scalar_lea.sflag [#allocation3], 1
    %2811 = vsyncpa %s2810, 1
    %2812 = vsyncpa [#allocation6], 1
    %2813 = vsyncpa [#allocation4], 1
    %s2814 = scalar_lea.sflag [#allocation4], 1
    %2815 = vsyncpa %s2814, 1

</llo_original>
